<compile_context>
chip_gen: v5e
topology: v5e:2x2
jax: 0.10.0
libtpu: 0.0.40
codegen_flags: <defaults>
</compile_context>

<pallas_src>
import math

import jax
import jax.numpy as jnp
from jax.experimental import pallas as pl
from jax.experimental.pallas import tpu as pltpu


def _attn_kernel(q_ref, k_ref, v_ref, m1_ref, m2_ref, o_ref):
    # q_ref/k_ref/v_ref: (hp, S, D)  -- hp heads per grid step
    # m1_ref/m2_ref:     (1, S, S)   -- additive masks, broadcast over heads
    # o_ref:             (hp, S, D)
    d = q_ref.shape[-1]
    scale = 1.0 / math.sqrt(d)

    q = q_ref[...]
    k = k_ref[...]

    # qk[h, s, t] = sum_d q[h, s, d] * k[h, t, d]  (no materialized K^T)
    qk = jnp.einsum("hsd,htd->hst", q, k,
                    preferred_element_type=jnp.float32) * scale

    def probs(m):  # m: (1, S, S) broadcasts over the head axis
        z = qk + m
        z = z - jnp.max(z, axis=-1, keepdims=True)
        e = jnp.exp(z)
        return e / jnp.sum(e, axis=-1, keepdims=True)   # exact normalization

    # softmax(qk+m1) @ V + softmax(qk+m2) @ V == (p1 + p2) @ V  ->  1 matmul.
    p = probs(m1_ref[...]) + probs(m2_ref[...])          # (hp, S, S), in [0, 2]

    # bf16 operands for the MXU, f32 accumulation (perf review #5).
    out = jnp.einsum("hst,htd->hsd",
                     p.astype(jnp.bfloat16),
                     v_ref[...].astype(jnp.bfloat16),
                     preferred_element_type=jnp.float32)
    o_ref[...] = out.astype(o_ref.dtype)


def _num_grid_steps(bh):
    """1 grid step on single-TC chips (v5e/v6e/interpret); 2 on dual-TC v7x."""
    try:
        kind = jax.devices()[0].device_kind.lower()
    except Exception:
        kind = ""
    if bh % 2 == 0 and ("v7" in kind or "7x" in kind):
        return 2
    return 1


def double_masked_attention(Q, K, V, mask1, mask2):
    """Q, K, V: (B, H, S, D) float32; mask1/mask2: (1, S, S) additive masks."""
    B, H, S, D = Q.shape
    BH = B * H
    steps = _num_grid_steps(BH)
    hp = BH // steps                      # heads packed per grid step

    q = Q.reshape(BH, S, D)
    k = K.reshape(BH, S, D)
    v = V.reshape(BH, S, D)
    m1 = jnp.asarray(mask1, dtype=jnp.float32).reshape(1, S, S)
    m2 = jnp.asarray(mask2, dtype=jnp.float32).reshape(1, S, S)

    out = pl.pallas_call(
        _attn_kernel,
        out_shape=jax.ShapeDtypeStruct((BH, S, D), jnp.float32),
        grid_spec=pltpu.PrefetchScalarGridSpec(
            num_scalar_prefetch=0,
            grid=(steps,),
            in_specs=[
                pl.BlockSpec((hp, S, D), lambda i: (i, 0, 0)),
                pl.BlockSpec((hp, S, D), lambda i: (i, 0, 0)),
                pl.BlockSpec((hp, S, D), lambda i: (i, 0, 0)),
                pl.BlockSpec((1, S, S), lambda i: (0, 0, 0)),
                pl.BlockSpec((1, S, S), lambda i: (0, 0, 0)),
            ],
            out_specs=pl.BlockSpec((hp, S, D), lambda i: (i, 0, 0)),
        ),
        compiler_params=pltpu.CompilerParams(
            dimension_semantics=("parallel",)),
    )(q, k, v, m1, m2)

    # Output already in (BH, S, D) layout -> a plain (free) reshape suffices.
    return out.reshape(B, H, S, D)


def reference(Q, K, V, mask1, mask2):
    """Faithful JAX port of the PyTorch forward (pure f32)."""
    scale = 1.0 / math.sqrt(Q.shape[-1])
    qk = jnp.einsum("bhsd,bhtd->bhst", Q, K) * scale

    def attend(m):
        w = jax.nn.softmax(qk + m[:, None, :, :], axis=-1)
        return jnp.einsum("bhst,bhtd->bhsd", w, V)

    return attend(mask1.astype(jnp.float32)) + attend(mask2.astype(jnp.float32))


if __name__ == "__main__":
    # Small shapes consistent with the module's (B, C, S, S) convention.
    B, H, S, D = 1, 4, 64, 64

    key = jax.random.PRNGKey(0)
    kq, kk, kv = jax.random.split(key, 3)
    Q = jax.random.normal(kq, (B, H, S, D), dtype=jnp.float32)
    K = jax.random.normal(kk, (B, H, S, D), dtype=jnp.float32)
    V = jax.random.normal(kv, (B, H, S, D), dtype=jnp.float32)

    # In the PyTorch reference, (rand > 0.7).fill_(-1e9) is a bool tensor of
    # all True, which contributes +1.0 when broadcast-added to float logits.
    mask1 = jnp.ones((1, S, S), dtype=jnp.float32)
    mask2 = jnp.ones((1, S, S), dtype=jnp.float32)

    out = double_masked_attention(Q, K, V, mask1, mask2)
    jax.block_until_ready(out)

    ref = reference(Q, K, V, mask1, mask2)
    # Tolerance covers the bf16 P@V matmul (operands rounded to bf16, f32
    # accumulation); softmax normalization itself is exact (no approx recip).
    assert jnp.allclose(out, ref, atol=3e-2, rtol=3e-2), "mismatch vs reference"

    print("KERNEL_OK")
</pallas_src>

<mosaic_0001>
module attributes {stable_mosaic.version = 11 : i64} {
  func.func @_attn_kernel(%arg0: i32, %arg1: memref<4x64x64xf32, #tpu.memory_space<vmem>>, %arg2: memref<4x64x64xf32, #tpu.memory_space<vmem>>, %arg3: memref<4x64x64xf32, #tpu.memory_space<vmem>>, %arg4: memref<1x64x64xf32, #tpu.memory_space<vmem>>, %arg5: memref<1x64x64xf32, #tpu.memory_space<vmem>>, %arg6: memref<4x64x64xf32, #tpu.memory_space<vmem>>) attributes {dimension_semantics = [#tpu.dimension_semantics<parallel>], iteration_bounds = array<i64: 1>, scalar_prefetch = 0 : i64, scratch_operands = 0 : i64, tpu.core_type = #tpu.core_type<tc>, window_params = [{transform_indices = @transform_0, window_bounds = array<i64: 4, 64, 64>}, {transform_indices = @transform_1, window_bounds = array<i64: 4, 64, 64>}, {transform_indices = @transform_2, window_bounds = array<i64: 4, 64, 64>}, {pipeline_mode = #tpu.pipeline_mode<synchronous>, transform_indices = @transform_3, window_bounds = array<i64: 1, 64, 64>}, {pipeline_mode = #tpu.pipeline_mode<synchronous>, transform_indices = @transform_4, window_bounds = array<i64: 1, 64, 64>}, {transform_indices = @transform_5, window_bounds = array<i64: 4, 64, 64>}]} {
    %c0 = arith.constant 0 : index
    %c0_0 = arith.constant 0 : index
    %c0_1 = arith.constant 0 : index
    %0 = vector.load %arg1[%c0, %c0_0, %c0_1] : memref<4x64x64xf32, #tpu.memory_space<vmem>>, vector<4x64x64xf32>
    %c0_2 = arith.constant 0 : index
    %c0_3 = arith.constant 0 : index
    %c0_4 = arith.constant 0 : index
    %1 = vector.load %arg2[%c0_2, %c0_3, %c0_4] : memref<4x64x64xf32, #tpu.memory_space<vmem>>, vector<4x64x64xf32>
    "tpu.trace_start"() <{level = 10 : i32, message = "hsd,htd->hst"}> : () -> ()
    %cst = arith.constant dense<0.000000e+00> : vector<4x64x64xf32>
    %2 = tpu.matmul %0, %1, %cst {dimension_numbers = #tpu.dot_dimension_numbers<[2], [2], [1], [1], [0, 0, 0, 1, 1, 1], [0], [0]>} : vector<4x64x64xf32>, vector<4x64x64xf32>, vector<4x64x64xf32> -> vector<4x64x64xf32>
    "tpu.trace_stop"() : () -> ()
    %cst_5 = arith.constant 1.250000e-01 : f32
    %3 = vector.broadcast %cst_5 : f32 to vector<4x64x64xf32>
    %4 = arith.mulf %2, %3 : vector<4x64x64xf32>
    %c0_6 = arith.constant 0 : index
    %c0_7 = arith.constant 0 : index
    %c0_8 = arith.constant 0 : index
    %5 = vector.load %arg4[%c0_6, %c0_7, %c0_8] : memref<1x64x64xf32, #tpu.memory_space<vmem>>, vector<1x64x64xf32>
    %6 = vector.broadcast %5 : vector<1x64x64xf32> to vector<4x64x64xf32>
    %7 = arith.addf %4, %6 : vector<4x64x64xf32>
    %cst_9 = arith.constant dense<0xFF800000> : vector<4x64xf32>
    %8 = vector.multi_reduction <maximumf>, %7, %cst_9 [2] : vector<4x64x64xf32> to vector<4x64xf32>
    %9 = vector.shape_cast %8 : vector<4x64xf32> to vector<4x64x1xf32>
    %10 = vector.broadcast %9 : vector<4x64x1xf32> to vector<4x64x64xf32>
    %11 = arith.subf %7, %10 : vector<4x64x64xf32>
    %12 = math.exp %11 : vector<4x64x64xf32>
    %cst_10 = arith.constant dense<0.000000e+00> : vector<4x64xf32>
    %13 = vector.multi_reduction <add>, %12, %cst_10 [2] : vector<4x64x64xf32> to vector<4x64xf32>
    %14 = vector.shape_cast %13 : vector<4x64xf32> to vector<4x64x1xf32>
    %15 = vector.broadcast %14 : vector<4x64x1xf32> to vector<4x64x64xf32>
    %16 = arith.divf %12, %15 : vector<4x64x64xf32>
    %c0_11 = arith.constant 0 : index
    %c0_12 = arith.constant 0 : index
    %c0_13 = arith.constant 0 : index
    %17 = vector.load %arg5[%c0_11, %c0_12, %c0_13] : memref<1x64x64xf32, #tpu.memory_space<vmem>>, vector<1x64x64xf32>
    %18 = vector.broadcast %17 : vector<1x64x64xf32> to vector<4x64x64xf32>
    %19 = arith.addf %4, %18 : vector<4x64x64xf32>
    %cst_14 = arith.constant dense<0xFF800000> : vector<4x64xf32>
    %20 = vector.multi_reduction <maximumf>, %19, %cst_14 [2] : vector<4x64x64xf32> to vector<4x64xf32>
    %21 = vector.shape_cast %20 : vector<4x64xf32> to vector<4x64x1xf32>
    %22 = vector.broadcast %21 : vector<4x64x1xf32> to vector<4x64x64xf32>
    %23 = arith.subf %19, %22 : vector<4x64x64xf32>
    %24 = math.exp %23 : vector<4x64x64xf32>
    %cst_15 = arith.constant dense<0.000000e+00> : vector<4x64xf32>
    %25 = vector.multi_reduction <add>, %24, %cst_15 [2] : vector<4x64x64xf32> to vector<4x64xf32>
    %26 = vector.shape_cast %25 : vector<4x64xf32> to vector<4x64x1xf32>
    %27 = vector.broadcast %26 : vector<4x64x1xf32> to vector<4x64x64xf32>
    %28 = arith.divf %24, %27 : vector<4x64x64xf32>
    %29 = arith.addf %16, %28 : vector<4x64x64xf32>
    %30 = arith.truncf %29 : vector<4x64x64xf32> to vector<4x64x64xbf16>
    %c0_16 = arith.constant 0 : index
    %c0_17 = arith.constant 0 : index
    %c0_18 = arith.constant 0 : index
    %31 = vector.load %arg3[%c0_16, %c0_17, %c0_18] : memref<4x64x64xf32, #tpu.memory_space<vmem>>, vector<4x64x64xf32>
    %32 = arith.truncf %31 : vector<4x64x64xf32> to vector<4x64x64xbf16>
    "tpu.trace_start"() <{level = 10 : i32, message = "hst,htd->hsd"}> : () -> ()
    %cst_19 = arith.constant dense<0.000000e+00> : vector<4x64x64xf32>
    %33 = tpu.matmul %30, %32, %cst_19 {dimension_numbers = #tpu.dot_dimension_numbers<[2], [1], [1], [2], [0, 0, 0, 1, 1, 2], [0], [0]>} : vector<4x64x64xbf16>, vector<4x64x64xbf16>, vector<4x64x64xf32> -> vector<4x64x64xf32>
    "tpu.trace_stop"() : () -> ()
    %c0_20 = arith.constant 0 : index
    %c0_21 = arith.constant 0 : index
    %c0_22 = arith.constant 0 : index
    %34 = vector.load %arg6[%c0_20, %c0_21, %c0_22] : memref<4x64x64xf32, #tpu.memory_space<vmem>>, vector<4x64x64xf32>
    tpu.vector_store %arg6[%c0_20, %c0_21, %c0_22], %33 {strides = array<i32>} : memref<4x64x64xf32, #tpu.memory_space<vmem>>, vector<4x64x64xf32>,
    return
  }
  func.func @transform_0(%arg0: i32) -> (i32, i32, i32) {
    %c0_i32 = arith.constant 0 : i32
    %c0_i32_0 = arith.constant 0 : i32
    %c0_i32_1 = arith.constant 0 : i32
    return %arg0, %c0_i32, %c0_i32_0 : i32, i32, i32
  }
  func.func @transform_1(%arg0: i32) -> (i32, i32, i32) {
    %c0_i32 = arith.constant 0 : i32
    %c0_i32_0 = arith.constant 0 : i32
    %c0_i32_1 = arith.constant 0 : i32
    return %arg0, %c0_i32, %c0_i32_0 : i32, i32, i32
  }
  func.func @transform_2(%arg0: i32) -> (i32, i32, i32) {
    %c0_i32 = arith.constant 0 : i32
    %c0_i32_0 = arith.constant 0 : i32
    %c0_i32_1 = arith.constant 0 : i32
    return %arg0, %c0_i32, %c0_i32_0 : i32, i32, i32
  }
  func.func @transform_3(%arg0: i32) -> (i32, i32, i32) {
    %c0_i32 = arith.constant 0 : i32
    %c0_i32_0 = arith.constant 0 : i32
    %c0_i32_1 = arith.constant 0 : i32
    %c0_i32_2 = arith.constant 0 : i32
    return %c0_i32, %c0_i32_0, %c0_i32_1 : i32, i32, i32
  }
  func.func @transform_4(%arg0: i32) -> (i32, i32, i32) {
    %c0_i32 = arith.constant 0 : i32
    %c0_i32_0 = arith.constant 0 : i32
    %c0_i32_1 = arith.constant 0 : i32
    %c0_i32_2 = arith.constant 0 : i32
    return %c0_i32, %c0_i32_0, %c0_i32_1 : i32, i32, i32
  }
  func.func @transform_5(%arg0: i32) -> (i32, i32, i32) {
    %c0_i32 = arith.constant 0 : i32
    %c0_i32_0 = arith.constant 0 : i32
    %c0_i32_1 = arith.constant 0 : i32
    return %arg0, %c0_i32, %c0_i32_0 : i32, i32, i32
  }
}

</mosaic_0001>

<llo_original>
// kernel: tpu_custom_call.1
$region0: #{tpu_custom_call.1}
  #allocation0 [shape = 'u32[]', space=smem, size = 0x4, offset = 0x4, fixed_abs, tag = 'smem constant byte address 0x4 - core index']
  #allocation1 [shape = 'u32[72,128]{1,0:T(1,128)}', space=vmem, size = 0x9000, scoped, tag = 'internal scratch']
  %s0 = inlined_call_operand.hbm [shape: f32[4,64,64], index: 0, kind: input, shape index: {}]
  %s1 = inlined_call_operand.hbm [shape: f32[4,64,64], index: 1, kind: input, shape index: {}]
  %s2 = inlined_call_operand.hbm [shape: f32[4,64,64], index: 2, kind: input, shape index: {}]
  %s3 = inlined_call_operand.hbm [shape: f32[1,64,64], index: 3, kind: input, shape index: {}]
  %s4 = inlined_call_operand.hbm [shape: f32[1,64,64], index: 4, kind: input, shape index: {}]
  %s5 = inlined_call_operand.hbm [shape: f32[4,64,64], index: 5, kind: output, shape index: {}]
  %s6 = sld [smem:[#allocation0]]
  $region50: #{tpu_custom_call.1} parent=0
    _
  %s8 = ssub.s32 1, %s6
  %s9 = scalar_select 0, %s8, %s6
  $region1: #{tpu_custom_call.1} parent=0
    #allocation2 [shape = 'u8[131072]{0}', space=vmem, size = 0x20000, scoped, tag = 'input window, operand 0, single buffered']
    #allocation3 [shape = 's32[1]{0}', space=sflag, size = 0x4, scoped, tag = 'scoped memory for tpu_custom_call.1']
    #allocation4 [shape = 's32[1]{0}', space=sflag, size = 0x4, scoped, tag = 'scoped memory for tpu_custom_call.1']
    #allocation5 [shape = 'u8[131072]{0}', space=vmem, size = 0x20000, scoped, tag = 'input window, operand 1, single buffered']
    #allocation6 [shape = 's32[1]{0}', space=sflag, size = 0x4, scoped, tag = 'scoped memory for tpu_custom_call.1']
    #allocation7 [shape = 'u8[131072]{0}', space=vmem, size = 0x20000, scoped, tag = 'input window, operand 2, single buffered']
    #allocation8 [shape = 'u8[32768]{0}', space=vmem, size = 0x8000, scoped, tag = 'input window, operand 3, single buffered']
    #allocation9 [shape = 's32[1]{0}', space=sflag, size = 0x4, scoped, tag = 'scoped memory for tpu_custom_call.1']
    #allocation10 [shape = 'u8[32768]{0}', space=vmem, size = 0x8000, scoped, tag = 'input window, operand 4, single buffered']
    #allocation11 [shape = 'u8[131072]{0}', space=vmem, size = 0x20000, scoped, tag = 'output window, operand 0, single buffered']
    %10 = vsyncpa [#allocation3], 0
    %11 = vsyncpa [#allocation6], 0
    %12 = vsyncpa [#allocation9], 0
    %13 = vsyncpa [#allocation4], 0
    // Predicated region
    $region2: #{tpu_custom_call.1} parent=1 // pred_check
      _
    $region3: #{tpu_custom_call.1} parent=1 // pred_check_branch
      %15 = sbr.rel (0) target = $region5
    $region4: #{tpu_custom_call.1} parent=1 // pred_region
      %17 = vsyncadd [#allocation3], 0
      %s18 = sshll.u32 %s0, 4
      %s19 = int_to_ptr.hbm [resolvable:$true] %s18
      %s20 = sshll.u32 [#allocation2], 4
      %s21 = int_to_ptr.vmem [resolvable:$true] %s20
      %26 = dma.hbm_to_vmem [thread:$0]  %s19, 4096, %s21, [#allocation3], 128, 128, 8
    $region5: #{tpu_custom_call.1} parent=1 // pred_fallthru
      _
    // Predicated region
    $region6: #{tpu_custom_call.1} parent=1 // pred_check
      _
    $region7: #{tpu_custom_call.1} parent=1 // pred_check_branch
      %28 = sbr.rel (0) target = $region9
    $region8: #{tpu_custom_call.1} parent=1 // pred_region
      %30 = vsyncadd [#allocation6], 0
      %s31 = sshll.u32 %s1, 4
      %s32 = int_to_ptr.hbm [resolvable:$true] %s31
      %s33 = sshll.u32 [#allocation5], 4
      %s34 = int_to_ptr.vmem [resolvable:$true] %s33
      %39 = dma.hbm_to_vmem [thread:$0]  %s32, 4096, %s34, [#allocation6], 128, 128, 8
    $region9: #{tpu_custom_call.1} parent=1 // pred_fallthru
      _
    // Predicated region
    $region10: #{tpu_custom_call.1} parent=1 // pred_check
      _
    $region11: #{tpu_custom_call.1} parent=1 // pred_check_branch
      %41 = sbr.rel (0) target = $region13
    $region12: #{tpu_custom_call.1} parent=1 // pred_region
      %43 = vsyncadd [#allocation6], 0
      %s44 = sshll.u32 %s2, 4
      %s45 = int_to_ptr.hbm [resolvable:$true] %s44
      %s46 = sshll.u32 [#allocation7], 4
      %s47 = int_to_ptr.vmem [resolvable:$true] %s46
      %52 = dma.hbm_to_vmem [thread:$0]  %s45, 4096, %s47, [#allocation6], 128, 128, 8
    $region13: #{tpu_custom_call.1} parent=1 // pred_fallthru
      _
    // Predicated region
    $region14: #{tpu_custom_call.1} parent=1 // pred_check
      _
    $region15: #{tpu_custom_call.1} parent=1 // pred_check_branch
      %54 = sbr.rel (0) target = $region17
    $region16: #{tpu_custom_call.1} parent=1 // pred_region
      %56 = vsyncadd [#allocation9], 0
      %s57 = sshll.u32 %s3, 4
      %s58 = int_to_ptr.hbm [resolvable:$true] %s57
      %s59 = sshll.u32 [#allocation8], 4
      %s60 = int_to_ptr.vmem [resolvable:$true] %s59
      %65 = dma.hbm_to_vmem [thread:$0]  %s58, 1024, %s60, [#allocation9], 128, 128, 8
    $region17: #{tpu_custom_call.1} parent=1 // pred_fallthru
      _
    // Predicated region
    $region18: #{tpu_custom_call.1} parent=1 // pred_check
      _
    $region19: #{tpu_custom_call.1} parent=1 // pred_check_branch
      %67 = sbr.rel (0) target = $region21
    $region20: #{tpu_custom_call.1} parent=1 // pred_region
      %69 = vsyncadd [#allocation9], 0
      %s70 = sshll.u32 %s4, 4
      %s71 = int_to_ptr.hbm [resolvable:$true] %s70
      %s72 = sshll.u32 [#allocation10], 4
      %s73 = int_to_ptr.vmem [resolvable:$true] %s72
      %78 = dma.hbm_to_vmem [thread:$0]  %s71, 1024, %s73, [#allocation9], 128, 128, 8
    $region21: #{tpu_custom_call.1} parent=1 // pred_fallthru
      _
    // Predicated region
    $region22: #{tpu_custom_call.1} parent=1 // pred_check
      _
    $region23: #{tpu_custom_call.1} parent=1 // pred_check_branch
      %80 = sbr.rel (0) target = $region25
    $region24: #{tpu_custom_call.1} parent=1 // pred_region
      %82 = dma.done [#allocation3], 4096
    $region25: #{tpu_custom_call.1} parent=1 // pred_fallthru
      _
    // Predicated region
    $region26: #{tpu_custom_call.1} parent=1 // pred_check
      _
    $region27: #{tpu_custom_call.1} parent=1 // pred_check_branch
      %84 = sbr.rel (0) target = $region29
    $region28: #{tpu_custom_call.1} parent=1 // pred_region
      %86 = dma.done [#allocation6], 4096
    $region29: #{tpu_custom_call.1} parent=1 // pred_fallthru
      _
    // Predicated region
    $region30: #{tpu_custom_call.1} parent=1 // pred_check
      _
    $region31: #{tpu_custom_call.1} parent=1 // pred_check_branch
      %88 = sbr.rel (0) target = $region33
    $region32: #{tpu_custom_call.1} parent=1 // pred_region
      %90 = dma.done [#allocation6], 4096
    $region33: #{tpu_custom_call.1} parent=1 // pred_fallthru
      _
    // Predicated region
    $region34: #{tpu_custom_call.1} parent=1 // pred_check
      _
    $region35: #{tpu_custom_call.1} parent=1 // pred_check_branch
      %92 = sbr.rel (0) target = $region37
    $region36: #{tpu_custom_call.1} parent=1 // pred_region
      %94 = dma.done [#allocation9], 1024
    $region37: #{tpu_custom_call.1} parent=1 // pred_fallthru
      _
    // Predicated region
    $region38: #{tpu_custom_call.1} parent=1 // pred_check
      _
    $region39: #{tpu_custom_call.1} parent=1 // pred_check_branch
      %96 = sbr.rel (0) target = $region41
    $region40: #{tpu_custom_call.1} parent=1 // pred_region
      %98 = dma.done [#allocation9], 1024
    $region41: #{tpu_custom_call.1} parent=1 // pred_fallthru
      _
    %v100 = vld [vmem:[#allocation2] sm:$0xff]
    %v101 = vld [vmem:[#allocation2 + $0x8] sm:$0xff]
    %v102 = vld [vmem:[#allocation2 + $0x10] sm:$0xff]
    %v103 = vld [vmem:[#allocation2 + $0x18] sm:$0xff]
    %v104 = vld [vmem:[#allocation2 + $0x20] sm:$0xff]
    %v105 = vld [vmem:[#allocation2 + $0x28] sm:$0xff]
    %v106 = vld [vmem:[#allocation2 + $0x30] sm:$0xff]
    %v107 = vld [vmem:[#allocation2 + $0x38] sm:$0xff]
    %v108 = vld [vmem:[#allocation2 + $0x40] sm:$0xff]
    %v109 = vld [vmem:[#allocation2 + $0x48] sm:$0xff]
    %v110 = vld [vmem:[#allocation2 + $0x50] sm:$0xff]
    %v111 = vld [vmem:[#allocation2 + $0x58] sm:$0xff]
    %v112 = vld [vmem:[#allocation2 + $0x60] sm:$0xff]
    %v113 = vld [vmem:[#allocation2 + $0x68] sm:$0xff]
    %v114 = vld [vmem:[#allocation2 + $0x70] sm:$0xff]
    %v115 = vld [vmem:[#allocation2 + $0x78] sm:$0xff]
    %v116 = vld [vmem:[#allocation2 + $0x80] sm:$0xff]
    %v117 = vld [vmem:[#allocation2 + $0x88] sm:$0xff]
    %v118 = vld [vmem:[#allocation2 + $0x90] sm:$0xff]
    %v119 = vld [vmem:[#allocation2 + $0x98] sm:$0xff]
    %v120 = vld [vmem:[#allocation2 + $0xa0] sm:$0xff]
    %v121 = vld [vmem:[#allocation2 + $0xa8] sm:$0xff]
    %v122 = vld [vmem:[#allocation2 + $0xb0] sm:$0xff]
    %v123 = vld [vmem:[#allocation2 + $0xb8] sm:$0xff]
    %v124 = vld [vmem:[#allocation2 + $0xc0] sm:$0xff]
    %v125 = vld [vmem:[#allocation2 + $0xc8] sm:$0xff]
    %v126 = vld [vmem:[#allocation2 + $0xd0] sm:$0xff]
    %v127 = vld [vmem:[#allocation2 + $0xd8] sm:$0xff]
    %v128 = vld [vmem:[#allocation2 + $0xe0] sm:$0xff]
    %v129 = vld [vmem:[#allocation2 + $0xe8] sm:$0xff]
    %v130 = vld [vmem:[#allocation2 + $0xf0] sm:$0xff]
    %v131 = vld [vmem:[#allocation2 + $0xf8] sm:$0xff]
    %v132 = vld [vmem:[#allocation5] sm:$0xff]
    %v133 = vld [vmem:[#allocation5 + $0x8] sm:$0xff]
    %v134 = vld [vmem:[#allocation5 + $0x10] sm:$0xff]
    %v135 = vld [vmem:[#allocation5 + $0x18] sm:$0xff]
    %v136 = vld [vmem:[#allocation5 + $0x20] sm:$0xff]
    %v137 = vld [vmem:[#allocation5 + $0x28] sm:$0xff]
    %v138 = vld [vmem:[#allocation5 + $0x30] sm:$0xff]
    %v139 = vld [vmem:[#allocation5 + $0x38] sm:$0xff]
    %v140 = vld [vmem:[#allocation5 + $0x40] sm:$0xff]
    %v141 = vld [vmem:[#allocation5 + $0x48] sm:$0xff]
    %v142 = vld [vmem:[#allocation5 + $0x50] sm:$0xff]
    %v143 = vld [vmem:[#allocation5 + $0x58] sm:$0xff]
    %v144 = vld [vmem:[#allocation5 + $0x60] sm:$0xff]
    %v145 = vld [vmem:[#allocation5 + $0x68] sm:$0xff]
    %v146 = vld [vmem:[#allocation5 + $0x70] sm:$0xff]
    %v147 = vld [vmem:[#allocation5 + $0x78] sm:$0xff]
    %v148 = vld [vmem:[#allocation5 + $0x80] sm:$0xff]
    %v149 = vld [vmem:[#allocation5 + $0x88] sm:$0xff]
    %v150 = vld [vmem:[#allocation5 + $0x90] sm:$0xff]
    %v151 = vld [vmem:[#allocation5 + $0x98] sm:$0xff]
    %v152 = vld [vmem:[#allocation5 + $0xa0] sm:$0xff]
    %v153 = vld [vmem:[#allocation5 + $0xa8] sm:$0xff]
    %v154 = vld [vmem:[#allocation5 + $0xb0] sm:$0xff]
    %v155 = vld [vmem:[#allocation5 + $0xb8] sm:$0xff]
    %v156 = vld [vmem:[#allocation5 + $0xc0] sm:$0xff]
    %v157 = vld [vmem:[#allocation5 + $0xc8] sm:$0xff]
    %v158 = vld [vmem:[#allocation5 + $0xd0] sm:$0xff]
    %v159 = vld [vmem:[#allocation5 + $0xd8] sm:$0xff]
    %v160 = vld [vmem:[#allocation5 + $0xe0] sm:$0xff]
    %v161 = vld [vmem:[#allocation5 + $0xe8] sm:$0xff]
    %v162 = vld [vmem:[#allocation5 + $0xf0] sm:$0xff]
    %v163 = vld [vmem:[#allocation5 + $0xf8] sm:$0xff]
    %vm164 = vcmask 523264
    %v166 = vsel %vm164, %v100, 0
    %v169 = vsel %vm164, %v101, 0
    %v172 = vsel %vm164, %v102, 0
    %v175 = vsel %vm164, %v103, 0
    %v178 = vsel %vm164, %v104, 0
    %v181 = vsel %vm164, %v105, 0
    %v184 = vsel %vm164, %v106, 0
    %v187 = vsel %vm164, %v107, 0
    %v190 = vsel %vm164, %v132, 0
    %v193 = vsel %vm164, %v133, 0
    %v196 = vsel %vm164, %v134, 0
    %v199 = vsel %vm164, %v135, 0
    %v202 = vsel %vm164, %v136, 0
    %v205 = vsel %vm164, %v137, 0
    %v208 = vsel %vm164, %v138, 0
    %v211 = vsel %vm164, %v139, 0
    %213 = vmatpush.xpose.msra.mxu0 0.0
    %214 = vmatpush.xpose.msra.mxu0 0.0
    %215 = vmatpush.xpose.msra.mxu0 0.0
    %216 = vmatpush.xpose.msra.mxu0 0.0
    %217 = vmatpush.xpose.msra.mxu0 0.0
    %218 = vmatpush.xpose.msra.mxu0 0.0
    %219 = vmatpush.xpose.msra.mxu0 0.0
    %220 = vmatpush.xpose.msra.mxu0 0.0
    %221 = vmatpush.xpose.msra.mxu0 %v211
    %222 = vmatpush.xpose.msra.mxu0 %v208
    %223 = vmatpush.xpose.msra.mxu0 %v205
    %224 = vmatpush.xpose.msra.mxu0 %v202
    %225 = vmatpush.xpose.msra.mxu0 %v199
    %226 = vmatpush.xpose.msra.mxu0 %v196
    %227 = vmatpush.xpose.msra.mxu0 %v193
    %228 = vmatpush.xpose.msra.mxu0 %v190
    %229 = vmatmul.f32.gmra.mxu0 %v166
    %v230 = vpop.f32.mrf.mxu0
    %v231 = vadd.f32 0.0, %v230
    %232 = vmatmul.f32.gmra.mxu0 %v169
    %v233 = vpop.f32.mrf.mxu0
    %v234 = vadd.f32 0.0, %v233
    %235 = vmatmul.f32.gmra.mxu0 %v172
    %v236 = vpop.f32.mrf.mxu0
    %v237 = vadd.f32 0.0, %v236
    %238 = vmatmul.f32.gmra.mxu0 %v175
    %v239 = vpop.f32.mrf.mxu0
    %v240 = vadd.f32 0.0, %v239
    %241 = vmatmul.f32.gmra.mxu0 %v178
    %v242 = vpop.f32.mrf.mxu0
    %v243 = vadd.f32 0.0, %v242
    %244 = vmatmul.f32.gmra.mxu0 %v181
    %v245 = vpop.f32.mrf.mxu0
    %v246 = vadd.f32 0.0, %v245
    %247 = vmatmul.f32.gmra.mxu0 %v184
    %v248 = vpop.f32.mrf.mxu0
    %v249 = vadd.f32 0.0, %v248
    %250 = vmatmul.f32.gmra.mxu0 %v187
    %v251 = vpop.f32.mrf.mxu0
    %v252 = vadd.f32 0.0, %v251
    %253 = vdwg.mxu0
    %v255 = vsel %vm164, %v108, 0
    %v258 = vsel %vm164, %v109, 0
    %v261 = vsel %vm164, %v110, 0
    %v264 = vsel %vm164, %v111, 0
    %v267 = vsel %vm164, %v112, 0
    %v270 = vsel %vm164, %v113, 0
    %v273 = vsel %vm164, %v114, 0
    %v276 = vsel %vm164, %v115, 0
    %v279 = vsel %vm164, %v140, 0
    %v282 = vsel %vm164, %v141, 0
    %v285 = vsel %vm164, %v142, 0
    %v288 = vsel %vm164, %v143, 0
    %v291 = vsel %vm164, %v144, 0
    %v294 = vsel %vm164, %v145, 0
    %v297 = vsel %vm164, %v146, 0
    %v300 = vsel %vm164, %v147, 0
    %302 = vmatpush.xpose.msra.mxu0 0.0
    %303 = vmatpush.xpose.msra.mxu0 0.0
    %304 = vmatpush.xpose.msra.mxu0 0.0
    %305 = vmatpush.xpose.msra.mxu0 0.0
    %306 = vmatpush.xpose.msra.mxu0 0.0
    %307 = vmatpush.xpose.msra.mxu0 0.0
    %308 = vmatpush.xpose.msra.mxu0 0.0
    %309 = vmatpush.xpose.msra.mxu0 0.0
    %310 = vmatpush.xpose.msra.mxu0 %v300
    %311 = vmatpush.xpose.msra.mxu0 %v297
    %312 = vmatpush.xpose.msra.mxu0 %v294
    %313 = vmatpush.xpose.msra.mxu0 %v291
    %314 = vmatpush.xpose.msra.mxu0 %v288
    %315 = vmatpush.xpose.msra.mxu0 %v285
    %316 = vmatpush.xpose.msra.mxu0 %v282
    %317 = vmatpush.xpose.msra.mxu0 %v279
    %318 = vmatmul.f32.gmra.mxu0 %v255
    %v319 = vpop.f32.mrf.mxu0
    %v320 = vadd.f32 0.0, %v319
    %321 = vmatmul.f32.gmra.mxu0 %v258
    %v322 = vpop.f32.mrf.mxu0
    %v323 = vadd.f32 0.0, %v322
    %324 = vmatmul.f32.gmra.mxu0 %v261
    %v325 = vpop.f32.mrf.mxu0
    %v326 = vadd.f32 0.0, %v325
    %327 = vmatmul.f32.gmra.mxu0 %v264
    %v328 = vpop.f32.mrf.mxu0
    %v329 = vadd.f32 0.0, %v328
    %330 = vmatmul.f32.gmra.mxu0 %v267
    %v331 = vpop.f32.mrf.mxu0
    %v332 = vadd.f32 0.0, %v331
    %333 = vmatmul.f32.gmra.mxu0 %v270
    %v334 = vpop.f32.mrf.mxu0
    %v335 = vadd.f32 0.0, %v334
    %336 = vmatmul.f32.gmra.mxu0 %v273
    %v337 = vpop.f32.mrf.mxu0
    %v338 = vadd.f32 0.0, %v337
    %339 = vmatmul.f32.gmra.mxu0 %v276
    %v340 = vpop.f32.mrf.mxu0
    %v341 = vadd.f32 0.0, %v340
    %342 = vdwg.mxu0
    %v344 = vsel %vm164, %v116, 0
    %v347 = vsel %vm164, %v117, 0
    %v350 = vsel %vm164, %v118, 0
    %v353 = vsel %vm164, %v119, 0
    %v356 = vsel %vm164, %v120, 0
    %v359 = vsel %vm164, %v121, 0
    %v362 = vsel %vm164, %v122, 0
    %v365 = vsel %vm164, %v123, 0
    %v368 = vsel %vm164, %v148, 0
    %v371 = vsel %vm164, %v149, 0
    %v374 = vsel %vm164, %v150, 0
    %v377 = vsel %vm164, %v151, 0
    %v380 = vsel %vm164, %v152, 0
    %v383 = vsel %vm164, %v153, 0
    %v386 = vsel %vm164, %v154, 0
    %v389 = vsel %vm164, %v155, 0
    %391 = vmatpush.xpose.msra.mxu0 0.0
    %392 = vmatpush.xpose.msra.mxu0 0.0
    %393 = vmatpush.xpose.msra.mxu0 0.0
    %394 = vmatpush.xpose.msra.mxu0 0.0
    %395 = vmatpush.xpose.msra.mxu0 0.0
    %396 = vmatpush.xpose.msra.mxu0 0.0
    %397 = vmatpush.xpose.msra.mxu0 0.0
    %398 = vmatpush.xpose.msra.mxu0 0.0
    %399 = vmatpush.xpose.msra.mxu0 %v389
    %400 = vmatpush.xpose.msra.mxu0 %v386
    %401 = vmatpush.xpose.msra.mxu0 %v383
    %402 = vmatpush.xpose.msra.mxu0 %v380
    %403 = vmatpush.xpose.msra.mxu0 %v377
    %404 = vmatpush.xpose.msra.mxu0 %v374
    %405 = vmatpush.xpose.msra.mxu0 %v371
    %406 = vmatpush.xpose.msra.mxu0 %v368
    %407 = vmatmul.f32.gmra.mxu0 %v344
    %v408 = vpop.f32.mrf.mxu0
    %v409 = vadd.f32 0.0, %v408
    %410 = vmatmul.f32.gmra.mxu0 %v347
    %v411 = vpop.f32.mrf.mxu0
    %v412 = vadd.f32 0.0, %v411
    %413 = vmatmul.f32.gmra.mxu0 %v350
    %v414 = vpop.f32.mrf.mxu0
    %v415 = vadd.f32 0.0, %v414
    %416 = vmatmul.f32.gmra.mxu0 %v353
    %v417 = vpop.f32.mrf.mxu0
    %v418 = vadd.f32 0.0, %v417
    %419 = vmatmul.f32.gmra.mxu0 %v356
    %v420 = vpop.f32.mrf.mxu0
    %v421 = vadd.f32 0.0, %v420
    %422 = vmatmul.f32.gmra.mxu0 %v359
    %v423 = vpop.f32.mrf.mxu0
    %v424 = vadd.f32 0.0, %v423
    %425 = vmatmul.f32.gmra.mxu0 %v362
    %v426 = vpop.f32.mrf.mxu0
    %v427 = vadd.f32 0.0, %v426
    %428 = vmatmul.f32.gmra.mxu0 %v365
    %v429 = vpop.f32.mrf.mxu0
    %v430 = vadd.f32 0.0, %v429
    %431 = vdwg.mxu0
    %v433 = vsel %vm164, %v124, 0
    %v436 = vsel %vm164, %v125, 0
    %v439 = vsel %vm164, %v126, 0
    %v442 = vsel %vm164, %v127, 0
    %v445 = vsel %vm164, %v128, 0
    %v448 = vsel %vm164, %v129, 0
    %v451 = vsel %vm164, %v130, 0
    %v454 = vsel %vm164, %v131, 0
    %v457 = vsel %vm164, %v156, 0
    %v460 = vsel %vm164, %v157, 0
    %v463 = vsel %vm164, %v158, 0
    %v466 = vsel %vm164, %v159, 0
    %v469 = vsel %vm164, %v160, 0
    %v472 = vsel %vm164, %v161, 0
    %v475 = vsel %vm164, %v162, 0
    %v478 = vsel %vm164, %v163, 0
    %480 = vmatpush.xpose.msra.mxu0 0.0
    %481 = vmatpush.xpose.msra.mxu0 0.0
    %482 = vmatpush.xpose.msra.mxu0 0.0
    %483 = vmatpush.xpose.msra.mxu0 0.0
    %484 = vmatpush.xpose.msra.mxu0 0.0
    %485 = vmatpush.xpose.msra.mxu0 0.0
    %486 = vmatpush.xpose.msra.mxu0 0.0
    %487 = vmatpush.xpose.msra.mxu0 0.0
    %488 = vmatpush.xpose.msra.mxu0 %v478
    %489 = vmatpush.xpose.msra.mxu0 %v475
    %490 = vmatpush.xpose.msra.mxu0 %v472
    %491 = vmatpush.xpose.msra.mxu0 %v469
    %492 = vmatpush.xpose.msra.mxu0 %v466
    %493 = vmatpush.xpose.msra.mxu0 %v463
    %494 = vmatpush.xpose.msra.mxu0 %v460
    %495 = vmatpush.xpose.msra.mxu0 %v457
    %496 = vmatmul.f32.gmra.mxu0 %v433
    %v497 = vpop.f32.mrf.mxu0
    %v498 = vadd.f32 0.0, %v497
    %499 = vmatmul.f32.gmra.mxu0 %v436
    %v500 = vpop.f32.mrf.mxu0
    %v501 = vadd.f32 0.0, %v500
    %502 = vmatmul.f32.gmra.mxu0 %v439
    %v503 = vpop.f32.mrf.mxu0
    %v504 = vadd.f32 0.0, %v503
    %505 = vmatmul.f32.gmra.mxu0 %v442
    %v506 = vpop.f32.mrf.mxu0
    %v507 = vadd.f32 0.0, %v506
    %508 = vmatmul.f32.gmra.mxu0 %v445
    %v509 = vpop.f32.mrf.mxu0
    %v510 = vadd.f32 0.0, %v509
    %511 = vmatmul.f32.gmra.mxu0 %v448
    %v512 = vpop.f32.mrf.mxu0
    %v513 = vadd.f32 0.0, %v512
    %514 = vmatmul.f32.gmra.mxu0 %v451
    %v515 = vpop.f32.mrf.mxu0
    %v516 = vadd.f32 0.0, %v515
    %517 = vmatmul.f32.gmra.mxu0 %v454
    %v518 = vpop.f32.mrf.mxu0
    %v519 = vadd.f32 0.0, %v518
    %520 = vdwg.mxu0
    %v521 = vmul.f32 %v231, 0.125
    %v522 = vmul.f32 %v234, 0.125
    %v523 = vmul.f32 %v237, 0.125
    %v524 = vmul.f32 %v240, 0.125
    %v525 = vmul.f32 %v243, 0.125
    %v526 = vmul.f32 %v246, 0.125
    %v527 = vmul.f32 %v249, 0.125
    %v528 = vmul.f32 %v252, 0.125
    %v529 = vmul.f32 %v320, 0.125
    %v530 = vmul.f32 %v323, 0.125
    %v531 = vmul.f32 %v326, 0.125
    %v532 = vmul.f32 %v329, 0.125
    %v533 = vmul.f32 %v332, 0.125
    %v534 = vmul.f32 %v335, 0.125
    %v535 = vmul.f32 %v338, 0.125
    %v536 = vmul.f32 %v341, 0.125
    %v537 = vmul.f32 %v409, 0.125
    %v538 = vmul.f32 %v412, 0.125
    %v539 = vmul.f32 %v415, 0.125
    %v540 = vmul.f32 %v418, 0.125
    %v541 = vmul.f32 %v421, 0.125
    %v542 = vmul.f32 %v424, 0.125
    %v543 = vmul.f32 %v427, 0.125
    %v544 = vmul.f32 %v430, 0.125
    %v545 = vmul.f32 %v498, 0.125
    %v546 = vmul.f32 %v501, 0.125
    %v547 = vmul.f32 %v504, 0.125
    %v548 = vmul.f32 %v507, 0.125
    %v549 = vmul.f32 %v510, 0.125
    %v550 = vmul.f32 %v513, 0.125
    %v551 = vmul.f32 %v516, 0.125
    %v552 = vmul.f32 %v519, 0.125
    %v553 = vld [vmem:[#allocation8] sm:$0xff]
    %v554 = vld [vmem:[#allocation8 + $0x8] sm:$0xff]
    %v555 = vld [vmem:[#allocation8 + $0x10] sm:$0xff]
    %v556 = vld [vmem:[#allocation8 + $0x18] sm:$0xff]
    %v557 = vld [vmem:[#allocation8 + $0x20] sm:$0xff]
    %v558 = vld [vmem:[#allocation8 + $0x28] sm:$0xff]
    %v559 = vld [vmem:[#allocation8 + $0x30] sm:$0xff]
    %v560 = vld [vmem:[#allocation8 + $0x38] sm:$0xff]
    %v561 = vadd.f32 %v521, %v553
    %v562 = vadd.f32 %v522, %v554
    %v563 = vadd.f32 %v523, %v555
    %v564 = vadd.f32 %v524, %v556
    %v565 = vadd.f32 %v525, %v557
    %v566 = vadd.f32 %v526, %v558
    %v567 = vadd.f32 %v527, %v559
    %v568 = vadd.f32 %v528, %v560
    %v569 = vadd.f32 %v529, %v553
    %v570 = vadd.f32 %v530, %v554
    %v571 = vadd.f32 %v531, %v555
    %v572 = vadd.f32 %v532, %v556
    %v573 = vadd.f32 %v533, %v557
    %v574 = vadd.f32 %v534, %v558
    %v575 = vadd.f32 %v535, %v559
    %v576 = vadd.f32 %v536, %v560
    %v577 = vadd.f32 %v537, %v553
    %v578 = vadd.f32 %v538, %v554
    %v579 = vadd.f32 %v539, %v555
    %v580 = vadd.f32 %v540, %v556
    %v581 = vadd.f32 %v541, %v557
    %v582 = vadd.f32 %v542, %v558
    %v583 = vadd.f32 %v543, %v559
    %v584 = vadd.f32 %v544, %v560
    %v585 = vadd.f32 %v545, %v553
    %v586 = vadd.f32 %v546, %v554
    %v587 = vadd.f32 %v547, %v555
    %v588 = vadd.f32 %v548, %v556
    %v589 = vadd.f32 %v549, %v557
    %v590 = vadd.f32 %v550, %v558
    %v591 = vadd.f32 %v551, %v559
    %v592 = vadd.f32 %v552, %v560
    %v593 = vsel %vm164, %v561, -inf
    %594 = vmax.xlane.f32.xlu0 %v593
    %v595 = vpop.xlane.xlu0 %594
    %v596 = vsel %vm164, %v562, -inf
    %597 = vmax.xlane.f32.xlu0 %v596
    %v598 = vpop.xlane.xlu0 %597
    %v599 = vsel %vm164, %v563, -inf
    %600 = vmax.xlane.f32.xlu0 %v599
    %v601 = vpop.xlane.xlu0 %600
    %v602 = vsel %vm164, %v564, -inf
    %603 = vmax.xlane.f32.xlu0 %v602
    %v604 = vpop.xlane.xlu0 %603
    %v605 = vsel %vm164, %v565, -inf
    %606 = vmax.xlane.f32.xlu0 %v605
    %v607 = vpop.xlane.xlu0 %606
    %v608 = vsel %vm164, %v566, -inf
    %609 = vmax.xlane.f32.xlu0 %v608
    %v610 = vpop.xlane.xlu0 %609
    %v611 = vsel %vm164, %v567, -inf
    %612 = vmax.xlane.f32.xlu0 %v611
    %v613 = vpop.xlane.xlu0 %612
    %v614 = vsel %vm164, %v568, -inf
    %615 = vmax.xlane.f32.xlu0 %v614
    %v616 = vpop.xlane.xlu0 %615
    %v617 = vsel %vm164, %v569, -inf
    %618 = vmax.xlane.f32.xlu0 %v617
    %v619 = vpop.xlane.xlu0 %618
    %v620 = vsel %vm164, %v570, -inf
    %621 = vmax.xlane.f32.xlu0 %v620
    %v622 = vpop.xlane.xlu0 %621
    %v623 = vsel %vm164, %v571, -inf
    %624 = vmax.xlane.f32.xlu0 %v623
    %v625 = vpop.xlane.xlu0 %624
    %v626 = vsel %vm164, %v572, -inf
    %627 = vmax.xlane.f32.xlu0 %v626
    %v628 = vpop.xlane.xlu0 %627
    %v629 = vsel %vm164, %v573, -inf
    %630 = vmax.xlane.f32.xlu0 %v629
    %v631 = vpop.xlane.xlu0 %630
    %v632 = vsel %vm164, %v574, -inf
    %633 = vmax.xlane.f32.xlu0 %v632
    %v634 = vpop.xlane.xlu0 %633
    %v635 = vsel %vm164, %v575, -inf
    %636 = vmax.xlane.f32.xlu0 %v635
    %v637 = vpop.xlane.xlu0 %636
    %v638 = vsel %vm164, %v576, -inf
    %639 = vmax.xlane.f32.xlu0 %v638
    %v640 = vpop.xlane.xlu0 %639
    %v641 = vsel %vm164, %v577, -inf
    %642 = vmax.xlane.f32.xlu0 %v641
    %v643 = vpop.xlane.xlu0 %642
    %v644 = vsel %vm164, %v578, -inf
    %645 = vmax.xlane.f32.xlu0 %v644
    %v646 = vpop.xlane.xlu0 %645
    %v647 = vsel %vm164, %v579, -inf
    %648 = vmax.xlane.f32.xlu0 %v647
    %v649 = vpop.xlane.xlu0 %648
    %v650 = vsel %vm164, %v580, -inf
    %651 = vmax.xlane.f32.xlu0 %v650
    %v652 = vpop.xlane.xlu0 %651
    %v653 = vsel %vm164, %v581, -inf
    %654 = vmax.xlane.f32.xlu0 %v653
    %v655 = vpop.xlane.xlu0 %654
    %v656 = vsel %vm164, %v582, -inf
    %657 = vmax.xlane.f32.xlu0 %v656
    %v658 = vpop.xlane.xlu0 %657
    %v659 = vsel %vm164, %v583, -inf
    %660 = vmax.xlane.f32.xlu0 %v659
    %v661 = vpop.xlane.xlu0 %660
    %v662 = vsel %vm164, %v584, -inf
    %663 = vmax.xlane.f32.xlu0 %v662
    %v664 = vpop.xlane.xlu0 %663
    %v665 = vsel %vm164, %v585, -inf
    %666 = vmax.xlane.f32.xlu0 %v665
    %v667 = vpop.xlane.xlu0 %666
    %v668 = vsel %vm164, %v586, -inf
    %669 = vmax.xlane.f32.xlu0 %v668
    %v670 = vpop.xlane.xlu0 %669
    %v671 = vsel %vm164, %v587, -inf
    %672 = vmax.xlane.f32.xlu0 %v671
    %v673 = vpop.xlane.xlu0 %672
    %v674 = vsel %vm164, %v588, -inf
    %675 = vmax.xlane.f32.xlu0 %v674
    %v676 = vpop.xlane.xlu0 %675
    %v677 = vsel %vm164, %v589, -inf
    %678 = vmax.xlane.f32.xlu0 %v677
    %v679 = vpop.xlane.xlu0 %678
    %v680 = vsel %vm164, %v590, -inf
    %681 = vmax.xlane.f32.xlu0 %v680
    %v682 = vpop.xlane.xlu0 %681
    %v683 = vsel %vm164, %v591, -inf
    %684 = vmax.xlane.f32.xlu0 %v683
    %v685 = vpop.xlane.xlu0 %684
    %v686 = vsel %vm164, %v592, -inf
    %687 = vmax.xlane.f32.xlu0 %v686
    %v688 = vpop.xlane.xlu0 %687
    %v689 = vsub.f32 %v561, %v595
    %v690 = vsub.f32 %v562, %v598
    %v691 = vsub.f32 %v563, %v601
    %v692 = vsub.f32 %v564, %v604
    %v693 = vsub.f32 %v565, %v607
    %v694 = vsub.f32 %v566, %v610
    %v695 = vsub.f32 %v567, %v613
    %v696 = vsub.f32 %v568, %v616
    %v697 = vsub.f32 %v569, %v619
    %v698 = vsub.f32 %v570, %v622
    %v699 = vsub.f32 %v571, %v625
    %v700 = vsub.f32 %v572, %v628
    %v701 = vsub.f32 %v573, %v631
    %v702 = vsub.f32 %v574, %v634
    %v703 = vsub.f32 %v575, %v637
    %v704 = vsub.f32 %v576, %v640
    %v705 = vsub.f32 %v577, %v643
    %v706 = vsub.f32 %v578, %v646
    %v707 = vsub.f32 %v579, %v649
    %v708 = vsub.f32 %v580, %v652
    %v709 = vsub.f32 %v581, %v655
    %v710 = vsub.f32 %v582, %v658
    %v711 = vsub.f32 %v583, %v661
    %v712 = vsub.f32 %v584, %v664
    %v713 = vsub.f32 %v585, %v667
    %v714 = vsub.f32 %v586, %v670
    %v715 = vsub.f32 %v587, %v673
    %v716 = vsub.f32 %v588, %v676
    %v717 = vsub.f32 %v589, %v679
    %v718 = vsub.f32 %v590, %v682
    %v719 = vsub.f32 %v591, %v685
    %v720 = vsub.f32 %v592, %v688
    %v721 = vmul.f32 %v689, 1.442695
    %v722 = vpow.pop %v721
    %v723 = vmul.f32 %v690, 1.442695
    %v724 = vpow.pop %v723
    %v725 = vmul.f32 %v691, 1.442695
    %v726 = vpow.pop %v725
    %v727 = vmul.f32 %v692, 1.442695
    %v728 = vpow.pop %v727
    %v729 = vmul.f32 %v693, 1.442695
    %v730 = vpow.pop %v729
    %v731 = vmul.f32 %v694, 1.442695
    %v732 = vpow.pop %v731
    %v733 = vmul.f32 %v695, 1.442695
    %v734 = vpow.pop %v733
    %v735 = vmul.f32 %v696, 1.442695
    %v736 = vpow.pop %v735
    %v737 = vmul.f32 %v697, 1.442695
    %v738 = vpow.pop %v737
    %v739 = vmul.f32 %v698, 1.442695
    %v740 = vpow.pop %v739
    %v741 = vmul.f32 %v699, 1.442695
    %v742 = vpow.pop %v741
    %v743 = vmul.f32 %v700, 1.442695
    %v744 = vpow.pop %v743
    %v745 = vmul.f32 %v701, 1.442695
    %v746 = vpow.pop %v745
    %v747 = vmul.f32 %v702, 1.442695
    %v748 = vpow.pop %v747
    %v749 = vmul.f32 %v703, 1.442695
    %v750 = vpow.pop %v749
    %v751 = vmul.f32 %v704, 1.442695
    %v752 = vpow.pop %v751
    %v753 = vmul.f32 %v705, 1.442695
    %v754 = vpow.pop %v753
    %v755 = vmul.f32 %v706, 1.442695
    %v756 = vpow.pop %v755
    %v757 = vmul.f32 %v707, 1.442695
    %v758 = vpow.pop %v757
    %v759 = vmul.f32 %v708, 1.442695
    %v760 = vpow.pop %v759
    %v761 = vmul.f32 %v709, 1.442695
    %v762 = vpow.pop %v761
    %v763 = vmul.f32 %v710, 1.442695
    %v764 = vpow.pop %v763
    %v765 = vmul.f32 %v711, 1.442695
    %v766 = vpow.pop %v765
    %v767 = vmul.f32 %v712, 1.442695
    %v768 = vpow.pop %v767
    %v769 = vmul.f32 %v713, 1.442695
    %v770 = vpow.pop %v769
    %v771 = vmul.f32 %v714, 1.442695
    %v772 = vpow.pop %v771
    %v773 = vmul.f32 %v715, 1.442695
    %v774 = vpow.pop %v773
    %v775 = vmul.f32 %v716, 1.442695
    %v776 = vpow.pop %v775
    %v777 = vmul.f32 %v717, 1.442695
    %v778 = vpow.pop %v777
    %v779 = vmul.f32 %v718, 1.442695
    %v780 = vpow.pop %v779
    %v781 = vmul.f32 %v719, 1.442695
    %v782 = vpow.pop %v781
    %v783 = vmul.f32 %v720, 1.442695
    %v784 = vpow.pop %v783
    %v785 = vsel %vm164, %v722, 0.0
    %786 = vadd.xlane.f32.xlu0 %v785
    %v787 = vpop.xlane.xlu0 %786
    %v788 = vsel %vm164, %v724, 0.0
    %789 = vadd.xlane.f32.xlu0 %v788
    %v790 = vpop.xlane.xlu0 %789
    %v791 = vsel %vm164, %v726, 0.0
    %792 = vadd.xlane.f32.xlu0 %v791
    %v793 = vpop.xlane.xlu0 %792
    %v794 = vsel %vm164, %v728, 0.0
    %795 = vadd.xlane.f32.xlu0 %v794
    %v796 = vpop.xlane.xlu0 %795
    %v797 = vsel %vm164, %v730, 0.0
    %798 = vadd.xlane.f32.xlu0 %v797
    %v799 = vpop.xlane.xlu0 %798
    %v800 = vsel %vm164, %v732, 0.0
    %801 = vadd.xlane.f32.xlu0 %v800
    %v802 = vpop.xlane.xlu0 %801
    %v803 = vsel %vm164, %v734, 0.0
    %804 = vadd.xlane.f32.xlu0 %v803
    %v805 = vpop.xlane.xlu0 %804
    %v806 = vsel %vm164, %v736, 0.0
    %807 = vadd.xlane.f32.xlu0 %v806
    %v808 = vpop.xlane.xlu0 %807
    %v809 = vsel %vm164, %v738, 0.0
    %810 = vadd.xlane.f32.xlu0 %v809
    %v811 = vpop.xlane.xlu0 %810
    %v812 = vsel %vm164, %v740, 0.0
    %813 = vadd.xlane.f32.xlu0 %v812
    %v814 = vpop.xlane.xlu0 %813
    %v815 = vsel %vm164, %v742, 0.0
    %816 = vadd.xlane.f32.xlu0 %v815
    %v817 = vpop.xlane.xlu0 %816
    %v818 = vsel %vm164, %v744, 0.0
    %819 = vadd.xlane.f32.xlu0 %v818
    %v820 = vpop.xlane.xlu0 %819
    %v821 = vsel %vm164, %v746, 0.0
    %822 = vadd.xlane.f32.xlu0 %v821
    %v823 = vpop.xlane.xlu0 %822
    %v824 = vsel %vm164, %v748, 0.0
    %825 = vadd.xlane.f32.xlu0 %v824
    %v826 = vpop.xlane.xlu0 %825
    %v827 = vsel %vm164, %v750, 0.0
    %828 = vadd.xlane.f32.xlu0 %v827
    %v829 = vpop.xlane.xlu0 %828
    %v830 = vsel %vm164, %v752, 0.0
    %831 = vadd.xlane.f32.xlu0 %v830
    %v832 = vpop.xlane.xlu0 %831
    %v833 = vsel %vm164, %v754, 0.0
    %834 = vadd.xlane.f32.xlu0 %v833
    %v835 = vpop.xlane.xlu0 %834
    %v836 = vsel %vm164, %v756, 0.0
    %837 = vadd.xlane.f32.xlu0 %v836
    %v838 = vpop.xlane.xlu0 %837
    %v839 = vsel %vm164, %v758, 0.0
    %840 = vadd.xlane.f32.xlu0 %v839
    %v841 = vpop.xlane.xlu0 %840
    %v842 = vsel %vm164, %v760, 0.0
    %843 = vadd.xlane.f32.xlu0 %v842
    %v844 = vpop.xlane.xlu0 %843
    %v845 = vsel %vm164, %v762, 0.0
    %846 = vadd.xlane.f32.xlu0 %v845
    %v847 = vpop.xlane.xlu0 %846
    %v848 = vsel %vm164, %v764, 0.0
    %849 = vadd.xlane.f32.xlu0 %v848
    %v850 = vpop.xlane.xlu0 %849
    %v851 = vsel %vm164, %v766, 0.0
    %852 = vadd.xlane.f32.xlu0 %v851
    %v853 = vpop.xlane.xlu0 %852
    %v854 = vsel %vm164, %v768, 0.0
    %855 = vadd.xlane.f32.xlu0 %v854
    %v856 = vpop.xlane.xlu0 %855
    %v857 = vsel %vm164, %v770, 0.0
    %858 = vadd.xlane.f32.xlu0 %v857
    %v859 = vpop.xlane.xlu0 %858
    %v860 = vsel %vm164, %v772, 0.0
    %861 = vadd.xlane.f32.xlu0 %v860
    %v862 = vpop.xlane.xlu0 %861
    %v863 = vsel %vm164, %v774, 0.0
    %864 = vadd.xlane.f32.xlu0 %v863
    %v865 = vpop.xlane.xlu0 %864
    %v866 = vsel %vm164, %v776, 0.0
    %867 = vadd.xlane.f32.xlu0 %v866
    %v868 = vpop.xlane.xlu0 %867
    %v869 = vsel %vm164, %v778, 0.0
    %870 = vadd.xlane.f32.xlu0 %v869
    %v871 = vpop.xlane.xlu0 %870
    %v872 = vsel %vm164, %v780, 0.0
    %873 = vadd.xlane.f32.xlu0 %v872
    %v874 = vpop.xlane.xlu0 %873
    %v875 = vsel %vm164, %v782, 0.0
    %876 = vadd.xlane.f32.xlu0 %v875
    %v877 = vpop.xlane.xlu0 %876
    %v878 = vsel %vm164, %v784, 0.0
    %879 = vadd.xlane.f32.xlu0 %v878
    %v880 = vpop.xlane.xlu0 %879
    %v881 = vrcp.pop %v787
    %v882 = vmul.f32 %v787, %v881
    %v883 = vsub.f32 1.0, %v882
    %v884 = vmul.f32 %v881, %v883
    %v885 = vadd.f32 %v881, %v884
    %vm886 = vweird.f32 %v787
    %vm887 = vweird.f32 %v881
    %vm888 = vmor %vm886, %vm887
    %v889 = vsel %vm888, %v881, %v885
    %v890 = vand.u32 2147483647, %v787
    %vm891 = vcmp.eq.f32.partialorder %v890, 8.507059e+37
    %v892 = vand.u32 %v787, 2147483648
    %v893 = vor.u32 1.1754944e-38, %v892
    %v894 = vsel %vm891, %v893, %v889
    %v895 = vmul.f32 %v722, %v894
    %v896 = vrcp.pop %v790
    %v897 = vmul.f32 %v790, %v896
    %v898 = vsub.f32 1.0, %v897
    %v899 = vmul.f32 %v896, %v898
    %v900 = vadd.f32 %v896, %v899
    %vm901 = vweird.f32 %v790
    %vm902 = vweird.f32 %v896
    %vm903 = vmor %vm901, %vm902
    %v904 = vsel %vm903, %v896, %v900
    %v905 = vand.u32 2147483647, %v790
    %vm906 = vcmp.eq.f32.partialorder %v905, 8.507059e+37
    %v907 = vand.u32 %v790, 2147483648
    %v908 = vor.u32 1.1754944e-38, %v907
    %v909 = vsel %vm906, %v908, %v904
    %v910 = vmul.f32 %v724, %v909
    %v911 = vrcp.pop %v793
    %v912 = vmul.f32 %v793, %v911
    %v913 = vsub.f32 1.0, %v912
    %v914 = vmul.f32 %v911, %v913
    %v915 = vadd.f32 %v911, %v914
    %vm916 = vweird.f32 %v793
    %vm917 = vweird.f32 %v911
    %vm918 = vmor %vm916, %vm917
    %v919 = vsel %vm918, %v911, %v915
    %v920 = vand.u32 2147483647, %v793
    %vm921 = vcmp.eq.f32.partialorder %v920, 8.507059e+37
    %v922 = vand.u32 %v793, 2147483648
    %v923 = vor.u32 1.1754944e-38, %v922
    %v924 = vsel %vm921, %v923, %v919
    %v925 = vmul.f32 %v726, %v924
    %v926 = vrcp.pop %v796
    %v927 = vmul.f32 %v796, %v926
    %v928 = vsub.f32 1.0, %v927
    %v929 = vmul.f32 %v926, %v928
    %v930 = vadd.f32 %v926, %v929
    %vm931 = vweird.f32 %v796
    %vm932 = vweird.f32 %v926
    %vm933 = vmor %vm931, %vm932
    %v934 = vsel %vm933, %v926, %v930
    %v935 = vand.u32 2147483647, %v796
    %vm936 = vcmp.eq.f32.partialorder %v935, 8.507059e+37
    %v937 = vand.u32 %v796, 2147483648
    %v938 = vor.u32 1.1754944e-38, %v937
    %v939 = vsel %vm936, %v938, %v934
    %v940 = vmul.f32 %v728, %v939
    %v941 = vrcp.pop %v799
    %v942 = vmul.f32 %v799, %v941
    %v943 = vsub.f32 1.0, %v942
    %v944 = vmul.f32 %v941, %v943
    %v945 = vadd.f32 %v941, %v944
    %vm946 = vweird.f32 %v799
    %vm947 = vweird.f32 %v941
    %vm948 = vmor %vm946, %vm947
    %v949 = vsel %vm948, %v941, %v945
    %v950 = vand.u32 2147483647, %v799
    %vm951 = vcmp.eq.f32.partialorder %v950, 8.507059e+37
    %v952 = vand.u32 %v799, 2147483648
    %v953 = vor.u32 1.1754944e-38, %v952
    %v954 = vsel %vm951, %v953, %v949
    %v955 = vmul.f32 %v730, %v954
    %v956 = vrcp.pop %v802
    %v957 = vmul.f32 %v802, %v956
    %v958 = vsub.f32 1.0, %v957
    %v959 = vmul.f32 %v956, %v958
    %v960 = vadd.f32 %v956, %v959
    %vm961 = vweird.f32 %v802
    %vm962 = vweird.f32 %v956
    %vm963 = vmor %vm961, %vm962
    %v964 = vsel %vm963, %v956, %v960
    %v965 = vand.u32 2147483647, %v802
    %vm966 = vcmp.eq.f32.partialorder %v965, 8.507059e+37
    %v967 = vand.u32 %v802, 2147483648
    %v968 = vor.u32 1.1754944e-38, %v967
    %v969 = vsel %vm966, %v968, %v964
    %v970 = vmul.f32 %v732, %v969
    %v971 = vrcp.pop %v805
    %v972 = vmul.f32 %v805, %v971
    %v973 = vsub.f32 1.0, %v972
    %v974 = vmul.f32 %v971, %v973
    %v975 = vadd.f32 %v971, %v974
    %vm976 = vweird.f32 %v805
    %vm977 = vweird.f32 %v971
    %vm978 = vmor %vm976, %vm977
    %v979 = vsel %vm978, %v971, %v975
    %v980 = vand.u32 2147483647, %v805
    %vm981 = vcmp.eq.f32.partialorder %v980, 8.507059e+37
    %v982 = vand.u32 %v805, 2147483648
    %v983 = vor.u32 1.1754944e-38, %v982
    %v984 = vsel %vm981, %v983, %v979
    %v985 = vmul.f32 %v734, %v984
    %v986 = vrcp.pop %v808
    %v987 = vmul.f32 %v808, %v986
    %v988 = vsub.f32 1.0, %v987
    %v989 = vmul.f32 %v986, %v988
    %v990 = vadd.f32 %v986, %v989
    %vm991 = vweird.f32 %v808
    %vm992 = vweird.f32 %v986
    %vm993 = vmor %vm991, %vm992
    %v994 = vsel %vm993, %v986, %v990
    %v995 = vand.u32 2147483647, %v808
    %vm996 = vcmp.eq.f32.partialorder %v995, 8.507059e+37
    %v997 = vand.u32 %v808, 2147483648
    %v998 = vor.u32 1.1754944e-38, %v997
    %v999 = vsel %vm996, %v998, %v994
    %v1000 = vmul.f32 %v736, %v999
    %v1001 = vrcp.pop %v811
    %v1002 = vmul.f32 %v811, %v1001
    %v1003 = vsub.f32 1.0, %v1002
    %v1004 = vmul.f32 %v1001, %v1003
    %v1005 = vadd.f32 %v1001, %v1004
    %vm1006 = vweird.f32 %v811
    %vm1007 = vweird.f32 %v1001
    %vm1008 = vmor %vm1006, %vm1007
    %v1009 = vsel %vm1008, %v1001, %v1005
    %v1010 = vand.u32 2147483647, %v811
    %vm1011 = vcmp.eq.f32.partialorder %v1010, 8.507059e+37
    %v1012 = vand.u32 %v811, 2147483648
    %v1013 = vor.u32 1.1754944e-38, %v1012
    %v1014 = vsel %vm1011, %v1013, %v1009
    %v1015 = vmul.f32 %v738, %v1014
    %v1016 = vrcp.pop %v814
    %v1017 = vmul.f32 %v814, %v1016
    %v1018 = vsub.f32 1.0, %v1017
    %v1019 = vmul.f32 %v1016, %v1018
    %v1020 = vadd.f32 %v1016, %v1019
    %vm1021 = vweird.f32 %v814
    %vm1022 = vweird.f32 %v1016
    %vm1023 = vmor %vm1021, %vm1022
    %v1024 = vsel %vm1023, %v1016, %v1020
    %v1025 = vand.u32 2147483647, %v814
    %vm1026 = vcmp.eq.f32.partialorder %v1025, 8.507059e+37
    %v1027 = vand.u32 %v814, 2147483648
    %v1028 = vor.u32 1.1754944e-38, %v1027
    %v1029 = vsel %vm1026, %v1028, %v1024
    %v1030 = vmul.f32 %v740, %v1029
    %v1031 = vrcp.pop %v817
    %v1032 = vmul.f32 %v817, %v1031
    %v1033 = vsub.f32 1.0, %v1032
    %v1034 = vmul.f32 %v1031, %v1033
    %v1035 = vadd.f32 %v1031, %v1034
    %vm1036 = vweird.f32 %v817
    %vm1037 = vweird.f32 %v1031
    %vm1038 = vmor %vm1036, %vm1037
    %v1039 = vsel %vm1038, %v1031, %v1035
    %v1040 = vand.u32 2147483647, %v817
    %vm1041 = vcmp.eq.f32.partialorder %v1040, 8.507059e+37
    %v1042 = vand.u32 %v817, 2147483648
    %v1043 = vor.u32 1.1754944e-38, %v1042
    %v1044 = vsel %vm1041, %v1043, %v1039
    %v1045 = vmul.f32 %v742, %v1044
    %v1046 = vrcp.pop %v820
    %v1047 = vmul.f32 %v820, %v1046
    %v1048 = vsub.f32 1.0, %v1047
    %v1049 = vmul.f32 %v1046, %v1048
    %v1050 = vadd.f32 %v1046, %v1049
    %vm1051 = vweird.f32 %v820
    %vm1052 = vweird.f32 %v1046
    %vm1053 = vmor %vm1051, %vm1052
    %v1054 = vsel %vm1053, %v1046, %v1050
    %v1055 = vand.u32 2147483647, %v820
    %vm1056 = vcmp.eq.f32.partialorder %v1055, 8.507059e+37
    %v1057 = vand.u32 %v820, 2147483648
    %v1058 = vor.u32 1.1754944e-38, %v1057
    %v1059 = vsel %vm1056, %v1058, %v1054
    %v1060 = vmul.f32 %v744, %v1059
    %v1061 = vrcp.pop %v823
    %v1062 = vmul.f32 %v823, %v1061
    %v1063 = vsub.f32 1.0, %v1062
    %v1064 = vmul.f32 %v1061, %v1063
    %v1065 = vadd.f32 %v1061, %v1064
    %vm1066 = vweird.f32 %v823
    %vm1067 = vweird.f32 %v1061
    %vm1068 = vmor %vm1066, %vm1067
    %v1069 = vsel %vm1068, %v1061, %v1065
    %v1070 = vand.u32 2147483647, %v823
    %vm1071 = vcmp.eq.f32.partialorder %v1070, 8.507059e+37
    %v1072 = vand.u32 %v823, 2147483648
    %v1073 = vor.u32 1.1754944e-38, %v1072
    %v1074 = vsel %vm1071, %v1073, %v1069
    %v1075 = vmul.f32 %v746, %v1074
    %v1076 = vrcp.pop %v826
    %v1077 = vmul.f32 %v826, %v1076
    %v1078 = vsub.f32 1.0, %v1077
    %v1079 = vmul.f32 %v1076, %v1078
    %v1080 = vadd.f32 %v1076, %v1079
    %vm1081 = vweird.f32 %v826
    %vm1082 = vweird.f32 %v1076
    %vm1083 = vmor %vm1081, %vm1082
    %v1084 = vsel %vm1083, %v1076, %v1080
    %v1085 = vand.u32 2147483647, %v826
    %vm1086 = vcmp.eq.f32.partialorder %v1085, 8.507059e+37
    %v1087 = vand.u32 %v826, 2147483648
    %v1088 = vor.u32 1.1754944e-38, %v1087
    %v1089 = vsel %vm1086, %v1088, %v1084
    %v1090 = vmul.f32 %v748, %v1089
    %v1091 = vrcp.pop %v829
    %v1092 = vmul.f32 %v829, %v1091
    %v1093 = vsub.f32 1.0, %v1092
    %v1094 = vmul.f32 %v1091, %v1093
    %v1095 = vadd.f32 %v1091, %v1094
    %vm1096 = vweird.f32 %v829
    %vm1097 = vweird.f32 %v1091
    %vm1098 = vmor %vm1096, %vm1097
    %v1099 = vsel %vm1098, %v1091, %v1095
    %v1100 = vand.u32 2147483647, %v829
    %vm1101 = vcmp.eq.f32.partialorder %v1100, 8.507059e+37
    %v1102 = vand.u32 %v829, 2147483648
    %v1103 = vor.u32 1.1754944e-38, %v1102
    %v1104 = vsel %vm1101, %v1103, %v1099
    %v1105 = vmul.f32 %v750, %v1104
    %v1106 = vrcp.pop %v832
    %v1107 = vmul.f32 %v832, %v1106
    %v1108 = vsub.f32 1.0, %v1107
    %v1109 = vmul.f32 %v1106, %v1108
    %v1110 = vadd.f32 %v1106, %v1109
    %vm1111 = vweird.f32 %v832
    %vm1112 = vweird.f32 %v1106
    %vm1113 = vmor %vm1111, %vm1112
    %v1114 = vsel %vm1113, %v1106, %v1110
    %v1115 = vand.u32 2147483647, %v832
    %vm1116 = vcmp.eq.f32.partialorder %v1115, 8.507059e+37
    %v1117 = vand.u32 %v832, 2147483648
    %v1118 = vor.u32 1.1754944e-38, %v1117
    %v1119 = vsel %vm1116, %v1118, %v1114
    %v1120 = vmul.f32 %v752, %v1119
    %v1121 = vrcp.pop %v835
    %v1122 = vmul.f32 %v835, %v1121
    %v1123 = vsub.f32 1.0, %v1122
    %v1124 = vmul.f32 %v1121, %v1123
    %v1125 = vadd.f32 %v1121, %v1124
    %vm1126 = vweird.f32 %v835
    %vm1127 = vweird.f32 %v1121
    %vm1128 = vmor %vm1126, %vm1127
    %v1129 = vsel %vm1128, %v1121, %v1125
    %v1130 = vand.u32 2147483647, %v835
    %vm1131 = vcmp.eq.f32.partialorder %v1130, 8.507059e+37
    %v1132 = vand.u32 %v835, 2147483648
    %v1133 = vor.u32 1.1754944e-38, %v1132
    %v1134 = vsel %vm1131, %v1133, %v1129
    %v1135 = vmul.f32 %v754, %v1134
    %v1136 = vrcp.pop %v838
    %v1137 = vmul.f32 %v838, %v1136
    %v1138 = vsub.f32 1.0, %v1137
    %v1139 = vmul.f32 %v1136, %v1138
    %v1140 = vadd.f32 %v1136, %v1139
    %vm1141 = vweird.f32 %v838
    %vm1142 = vweird.f32 %v1136
    %vm1143 = vmor %vm1141, %vm1142
    %v1144 = vsel %vm1143, %v1136, %v1140
    %v1145 = vand.u32 2147483647, %v838
    %vm1146 = vcmp.eq.f32.partialorder %v1145, 8.507059e+37
    %v1147 = vand.u32 %v838, 2147483648
    %v1148 = vor.u32 1.1754944e-38, %v1147
    %v1149 = vsel %vm1146, %v1148, %v1144
    %v1150 = vmul.f32 %v756, %v1149
    %v1151 = vrcp.pop %v841
    %v1152 = vmul.f32 %v841, %v1151
    %v1153 = vsub.f32 1.0, %v1152
    %v1154 = vmul.f32 %v1151, %v1153
    %v1155 = vadd.f32 %v1151, %v1154
    %vm1156 = vweird.f32 %v841
    %vm1157 = vweird.f32 %v1151
    %vm1158 = vmor %vm1156, %vm1157
    %v1159 = vsel %vm1158, %v1151, %v1155
    %v1160 = vand.u32 2147483647, %v841
    %vm1161 = vcmp.eq.f32.partialorder %v1160, 8.507059e+37
    %v1162 = vand.u32 %v841, 2147483648
    %v1163 = vor.u32 1.1754944e-38, %v1162
    %v1164 = vsel %vm1161, %v1163, %v1159
    %v1165 = vmul.f32 %v758, %v1164
    %v1166 = vrcp.pop %v844
    %v1167 = vmul.f32 %v844, %v1166
    %v1168 = vsub.f32 1.0, %v1167
    %v1169 = vmul.f32 %v1166, %v1168
    %v1170 = vadd.f32 %v1166, %v1169
    %vm1171 = vweird.f32 %v844
    %vm1172 = vweird.f32 %v1166
    %vm1173 = vmor %vm1171, %vm1172
    %v1174 = vsel %vm1173, %v1166, %v1170
    %v1175 = vand.u32 2147483647, %v844
    %vm1176 = vcmp.eq.f32.partialorder %v1175, 8.507059e+37
    %v1177 = vand.u32 %v844, 2147483648
    %v1178 = vor.u32 1.1754944e-38, %v1177
    %v1179 = vsel %vm1176, %v1178, %v1174
    %v1180 = vmul.f32 %v760, %v1179
    %v1181 = vrcp.pop %v847
    %v1182 = vmul.f32 %v847, %v1181
    %v1183 = vsub.f32 1.0, %v1182
    %v1184 = vmul.f32 %v1181, %v1183
    %v1185 = vadd.f32 %v1181, %v1184
    %vm1186 = vweird.f32 %v847
    %vm1187 = vweird.f32 %v1181
    %vm1188 = vmor %vm1186, %vm1187
    %v1189 = vsel %vm1188, %v1181, %v1185
    %v1190 = vand.u32 2147483647, %v847
    %vm1191 = vcmp.eq.f32.partialorder %v1190, 8.507059e+37
    %v1192 = vand.u32 %v847, 2147483648
    %v1193 = vor.u32 1.1754944e-38, %v1192
    %v1194 = vsel %vm1191, %v1193, %v1189
    %v1195 = vmul.f32 %v762, %v1194
    %v1196 = vrcp.pop %v850
    %v1197 = vmul.f32 %v850, %v1196
    %v1198 = vsub.f32 1.0, %v1197
    %v1199 = vmul.f32 %v1196, %v1198
    %v1200 = vadd.f32 %v1196, %v1199
    %vm1201 = vweird.f32 %v850
    %vm1202 = vweird.f32 %v1196
    %vm1203 = vmor %vm1201, %vm1202
    %v1204 = vsel %vm1203, %v1196, %v1200
    %v1205 = vand.u32 2147483647, %v850
    %vm1206 = vcmp.eq.f32.partialorder %v1205, 8.507059e+37
    %v1207 = vand.u32 %v850, 2147483648
    %v1208 = vor.u32 1.1754944e-38, %v1207
    %v1209 = vsel %vm1206, %v1208, %v1204
    %v1210 = vmul.f32 %v764, %v1209
    %v1211 = vrcp.pop %v853
    %v1212 = vmul.f32 %v853, %v1211
    %v1213 = vsub.f32 1.0, %v1212
    %v1214 = vmul.f32 %v1211, %v1213
    %v1215 = vadd.f32 %v1211, %v1214
    %vm1216 = vweird.f32 %v853
    %vm1217 = vweird.f32 %v1211
    %vm1218 = vmor %vm1216, %vm1217
    %v1219 = vsel %vm1218, %v1211, %v1215
    %v1220 = vand.u32 2147483647, %v853
    %vm1221 = vcmp.eq.f32.partialorder %v1220, 8.507059e+37
    %v1222 = vand.u32 %v853, 2147483648
    %v1223 = vor.u32 1.1754944e-38, %v1222
    %v1224 = vsel %vm1221, %v1223, %v1219
    %v1225 = vmul.f32 %v766, %v1224
    %v1226 = vrcp.pop %v856
    %v1227 = vmul.f32 %v856, %v1226
    %v1228 = vsub.f32 1.0, %v1227
    %v1229 = vmul.f32 %v1226, %v1228
    %v1230 = vadd.f32 %v1226, %v1229
    %vm1231 = vweird.f32 %v856
    %vm1232 = vweird.f32 %v1226
    %vm1233 = vmor %vm1231, %vm1232
    %v1234 = vsel %vm1233, %v1226, %v1230
    %v1235 = vand.u32 2147483647, %v856
    %vm1236 = vcmp.eq.f32.partialorder %v1235, 8.507059e+37
    %v1237 = vand.u32 %v856, 2147483648
    %v1238 = vor.u32 1.1754944e-38, %v1237
    %v1239 = vsel %vm1236, %v1238, %v1234
    %v1240 = vmul.f32 %v768, %v1239
    %v1241 = vrcp.pop %v859
    %v1242 = vmul.f32 %v859, %v1241
    %v1243 = vsub.f32 1.0, %v1242
    %v1244 = vmul.f32 %v1241, %v1243
    %v1245 = vadd.f32 %v1241, %v1244
    %vm1246 = vweird.f32 %v859
    %vm1247 = vweird.f32 %v1241
    %vm1248 = vmor %vm1246, %vm1247
    %v1249 = vsel %vm1248, %v1241, %v1245
    %v1250 = vand.u32 2147483647, %v859
    %vm1251 = vcmp.eq.f32.partialorder %v1250, 8.507059e+37
    %v1252 = vand.u32 %v859, 2147483648
    %v1253 = vor.u32 1.1754944e-38, %v1252
    %v1254 = vsel %vm1251, %v1253, %v1249
    %v1255 = vmul.f32 %v770, %v1254
    %v1256 = vrcp.pop %v862
    %v1257 = vmul.f32 %v862, %v1256
    %v1258 = vsub.f32 1.0, %v1257
    %v1259 = vmul.f32 %v1256, %v1258
    %v1260 = vadd.f32 %v1256, %v1259
    %vm1261 = vweird.f32 %v862
    %vm1262 = vweird.f32 %v1256
    %vm1263 = vmor %vm1261, %vm1262
    %v1264 = vsel %vm1263, %v1256, %v1260
    %v1265 = vand.u32 2147483647, %v862
    %vm1266 = vcmp.eq.f32.partialorder %v1265, 8.507059e+37
    %v1267 = vand.u32 %v862, 2147483648
    %v1268 = vor.u32 1.1754944e-38, %v1267
    %v1269 = vsel %vm1266, %v1268, %v1264
    %v1270 = vmul.f32 %v772, %v1269
    %v1271 = vrcp.pop %v865
    %v1272 = vmul.f32 %v865, %v1271
    %v1273 = vsub.f32 1.0, %v1272
    %v1274 = vmul.f32 %v1271, %v1273
    %v1275 = vadd.f32 %v1271, %v1274
    %vm1276 = vweird.f32 %v865
    %vm1277 = vweird.f32 %v1271
    %vm1278 = vmor %vm1276, %vm1277
    %v1279 = vsel %vm1278, %v1271, %v1275
    %v1280 = vand.u32 2147483647, %v865
    %vm1281 = vcmp.eq.f32.partialorder %v1280, 8.507059e+37
    %v1282 = vand.u32 %v865, 2147483648
    %v1283 = vor.u32 1.1754944e-38, %v1282
    %v1284 = vsel %vm1281, %v1283, %v1279
    %v1285 = vmul.f32 %v774, %v1284
    %v1286 = vrcp.pop %v868
    %v1287 = vmul.f32 %v868, %v1286
    %v1288 = vsub.f32 1.0, %v1287
    %v1289 = vmul.f32 %v1286, %v1288
    %v1290 = vadd.f32 %v1286, %v1289
    %vm1291 = vweird.f32 %v868
    %vm1292 = vweird.f32 %v1286
    %vm1293 = vmor %vm1291, %vm1292
    %v1294 = vsel %vm1293, %v1286, %v1290
    %v1295 = vand.u32 2147483647, %v868
    %vm1296 = vcmp.eq.f32.partialorder %v1295, 8.507059e+37
    %v1297 = vand.u32 %v868, 2147483648
    %v1298 = vor.u32 1.1754944e-38, %v1297
    %v1299 = vsel %vm1296, %v1298, %v1294
    %v1300 = vmul.f32 %v776, %v1299
    %v1301 = vrcp.pop %v871
    %v1302 = vmul.f32 %v871, %v1301
    %v1303 = vsub.f32 1.0, %v1302
    %v1304 = vmul.f32 %v1301, %v1303
    %v1305 = vadd.f32 %v1301, %v1304
    %vm1306 = vweird.f32 %v871
    %vm1307 = vweird.f32 %v1301
    %vm1308 = vmor %vm1306, %vm1307
    %v1309 = vsel %vm1308, %v1301, %v1305
    %v1310 = vand.u32 2147483647, %v871
    %vm1311 = vcmp.eq.f32.partialorder %v1310, 8.507059e+37
    %v1312 = vand.u32 %v871, 2147483648
    %v1313 = vor.u32 1.1754944e-38, %v1312
    %v1314 = vsel %vm1311, %v1313, %v1309
    %v1315 = vmul.f32 %v778, %v1314
    %v1316 = vrcp.pop %v874
    %v1317 = vmul.f32 %v874, %v1316
    %v1318 = vsub.f32 1.0, %v1317
    %v1319 = vmul.f32 %v1316, %v1318
    %v1320 = vadd.f32 %v1316, %v1319
    %vm1321 = vweird.f32 %v874
    %vm1322 = vweird.f32 %v1316
    %vm1323 = vmor %vm1321, %vm1322
    %v1324 = vsel %vm1323, %v1316, %v1320
    %v1325 = vand.u32 2147483647, %v874
    %vm1326 = vcmp.eq.f32.partialorder %v1325, 8.507059e+37
    %v1327 = vand.u32 %v874, 2147483648
    %v1328 = vor.u32 1.1754944e-38, %v1327
    %v1329 = vsel %vm1326, %v1328, %v1324
    %v1330 = vmul.f32 %v780, %v1329
    %v1331 = vrcp.pop %v877
    %v1332 = vmul.f32 %v877, %v1331
    %v1333 = vsub.f32 1.0, %v1332
    %v1334 = vmul.f32 %v1331, %v1333
    %v1335 = vadd.f32 %v1331, %v1334
    %vm1336 = vweird.f32 %v877
    %vm1337 = vweird.f32 %v1331
    %vm1338 = vmor %vm1336, %vm1337
    %v1339 = vsel %vm1338, %v1331, %v1335
    %v1340 = vand.u32 2147483647, %v877
    %vm1341 = vcmp.eq.f32.partialorder %v1340, 8.507059e+37
    %v1342 = vand.u32 %v877, 2147483648
    %v1343 = vor.u32 1.1754944e-38, %v1342
    %v1344 = vsel %vm1341, %v1343, %v1339
    %v1345 = vmul.f32 %v782, %v1344
    %v1346 = vrcp.pop %v880
    %v1347 = vmul.f32 %v880, %v1346
    %v1348 = vsub.f32 1.0, %v1347
    %v1349 = vmul.f32 %v1346, %v1348
    %v1350 = vadd.f32 %v1346, %v1349
    %vm1351 = vweird.f32 %v880
    %vm1352 = vweird.f32 %v1346
    %vm1353 = vmor %vm1351, %vm1352
    %v1354 = vsel %vm1353, %v1346, %v1350
    %v1355 = vand.u32 2147483647, %v880
    %vm1356 = vcmp.eq.f32.partialorder %v1355, 8.507059e+37
    %v1357 = vand.u32 %v880, 2147483648
    %v1358 = vor.u32 1.1754944e-38, %v1357
    %v1359 = vsel %vm1356, %v1358, %v1354
    %v1360 = vmul.f32 %v784, %v1359
    %v1361 = vld [vmem:[#allocation10] sm:$0xff]
    %v1362 = vld [vmem:[#allocation10 + $0x8] sm:$0xff]
    %v1363 = vld [vmem:[#allocation10 + $0x10] sm:$0xff]
    %v1364 = vld [vmem:[#allocation10 + $0x18] sm:$0xff]
    %v1365 = vld [vmem:[#allocation10 + $0x20] sm:$0xff]
    %v1366 = vld [vmem:[#allocation10 + $0x28] sm:$0xff]
    %v1367 = vld [vmem:[#allocation10 + $0x30] sm:$0xff]
    %v1368 = vld [vmem:[#allocation10 + $0x38] sm:$0xff]
    %v1369 = vadd.f32 %v521, %v1361
    %v1370 = vadd.f32 %v522, %v1362
    %v1371 = vadd.f32 %v523, %v1363
    %v1372 = vadd.f32 %v524, %v1364
    %v1373 = vadd.f32 %v525, %v1365
    %v1374 = vadd.f32 %v526, %v1366
    %v1375 = vadd.f32 %v527, %v1367
    %v1376 = vadd.f32 %v528, %v1368
    %v1377 = vadd.f32 %v529, %v1361
    %v1378 = vadd.f32 %v530, %v1362
    %v1379 = vadd.f32 %v531, %v1363
    %v1380 = vadd.f32 %v532, %v1364
    %v1381 = vadd.f32 %v533, %v1365
    %v1382 = vadd.f32 %v534, %v1366
    %v1383 = vadd.f32 %v535, %v1367
    %v1384 = vadd.f32 %v536, %v1368
    %v1385 = vadd.f32 %v537, %v1361
    %v1386 = vadd.f32 %v538, %v1362
    %v1387 = vadd.f32 %v539, %v1363
    %v1388 = vadd.f32 %v540, %v1364
    %v1389 = vadd.f32 %v541, %v1365
    %v1390 = vadd.f32 %v542, %v1366
    %v1391 = vadd.f32 %v543, %v1367
    %v1392 = vadd.f32 %v544, %v1368
    %v1393 = vadd.f32 %v545, %v1361
    %v1394 = vadd.f32 %v546, %v1362
    %v1395 = vadd.f32 %v547, %v1363
    %v1396 = vadd.f32 %v548, %v1364
    %v1397 = vadd.f32 %v549, %v1365
    %v1398 = vadd.f32 %v550, %v1366
    %v1399 = vadd.f32 %v551, %v1367
    %v1400 = vadd.f32 %v552, %v1368
    %v1401 = vsel %vm164, %v1369, -inf
    %1402 = vmax.xlane.f32.xlu0 %v1401
    %v1403 = vpop.xlane.xlu0 %1402
    %v1404 = vsel %vm164, %v1370, -inf
    %1405 = vmax.xlane.f32.xlu0 %v1404
    %v1406 = vpop.xlane.xlu0 %1405
    %v1407 = vsel %vm164, %v1371, -inf
    %1408 = vmax.xlane.f32.xlu0 %v1407
    %v1409 = vpop.xlane.xlu0 %1408
    %v1410 = vsel %vm164, %v1372, -inf
    %1411 = vmax.xlane.f32.xlu0 %v1410
    %v1412 = vpop.xlane.xlu0 %1411
    %v1413 = vsel %vm164, %v1373, -inf
    %1414 = vmax.xlane.f32.xlu0 %v1413
    %v1415 = vpop.xlane.xlu0 %1414
    %v1416 = vsel %vm164, %v1374, -inf
    %1417 = vmax.xlane.f32.xlu0 %v1416
    %v1418 = vpop.xlane.xlu0 %1417
    %v1419 = vsel %vm164, %v1375, -inf
    %1420 = vmax.xlane.f32.xlu0 %v1419
    %v1421 = vpop.xlane.xlu0 %1420
    %v1422 = vsel %vm164, %v1376, -inf
    %1423 = vmax.xlane.f32.xlu0 %v1422
    %v1424 = vpop.xlane.xlu0 %1423
    %v1425 = vsel %vm164, %v1377, -inf
    %1426 = vmax.xlane.f32.xlu0 %v1425
    %v1427 = vpop.xlane.xlu0 %1426
    %v1428 = vsel %vm164, %v1378, -inf
    %1429 = vmax.xlane.f32.xlu0 %v1428
    %v1430 = vpop.xlane.xlu0 %1429
    %v1431 = vsel %vm164, %v1379, -inf
    %1432 = vmax.xlane.f32.xlu0 %v1431
    %v1433 = vpop.xlane.xlu0 %1432
    %v1434 = vsel %vm164, %v1380, -inf
    %1435 = vmax.xlane.f32.xlu0 %v1434
    %v1436 = vpop.xlane.xlu0 %1435
    %v1437 = vsel %vm164, %v1381, -inf
    %1438 = vmax.xlane.f32.xlu0 %v1437
    %v1439 = vpop.xlane.xlu0 %1438
    %v1440 = vsel %vm164, %v1382, -inf
    %1441 = vmax.xlane.f32.xlu0 %v1440
    %v1442 = vpop.xlane.xlu0 %1441
    %v1443 = vsel %vm164, %v1383, -inf
    %1444 = vmax.xlane.f32.xlu0 %v1443
    %v1445 = vpop.xlane.xlu0 %1444
    %v1446 = vsel %vm164, %v1384, -inf
    %1447 = vmax.xlane.f32.xlu0 %v1446
    %v1448 = vpop.xlane.xlu0 %1447
    %v1449 = vsel %vm164, %v1385, -inf
    %1450 = vmax.xlane.f32.xlu0 %v1449
    %v1451 = vpop.xlane.xlu0 %1450
    %v1452 = vsel %vm164, %v1386, -inf
    %1453 = vmax.xlane.f32.xlu0 %v1452
    %v1454 = vpop.xlane.xlu0 %1453
    %v1455 = vsel %vm164, %v1387, -inf
    %1456 = vmax.xlane.f32.xlu0 %v1455
    %v1457 = vpop.xlane.xlu0 %1456
    %v1458 = vsel %vm164, %v1388, -inf
    %1459 = vmax.xlane.f32.xlu0 %v1458
    %v1460 = vpop.xlane.xlu0 %1459
    %v1461 = vsel %vm164, %v1389, -inf
    %1462 = vmax.xlane.f32.xlu0 %v1461
    %v1463 = vpop.xlane.xlu0 %1462
    %v1464 = vsel %vm164, %v1390, -inf
    %1465 = vmax.xlane.f32.xlu0 %v1464
    %v1466 = vpop.xlane.xlu0 %1465
    %v1467 = vsel %vm164, %v1391, -inf
    %1468 = vmax.xlane.f32.xlu0 %v1467
    %v1469 = vpop.xlane.xlu0 %1468
    %v1470 = vsel %vm164, %v1392, -inf
    %1471 = vmax.xlane.f32.xlu0 %v1470
    %v1472 = vpop.xlane.xlu0 %1471
    %v1473 = vsel %vm164, %v1393, -inf
    %1474 = vmax.xlane.f32.xlu0 %v1473
    %v1475 = vpop.xlane.xlu0 %1474
    %v1476 = vsel %vm164, %v1394, -inf
    %1477 = vmax.xlane.f32.xlu0 %v1476
    %v1478 = vpop.xlane.xlu0 %1477
    %v1479 = vsel %vm164, %v1395, -inf
    %1480 = vmax.xlane.f32.xlu0 %v1479
    %v1481 = vpop.xlane.xlu0 %1480
    %v1482 = vsel %vm164, %v1396, -inf
    %1483 = vmax.xlane.f32.xlu0 %v1482
    %v1484 = vpop.xlane.xlu0 %1483
    %v1485 = vsel %vm164, %v1397, -inf
    %1486 = vmax.xlane.f32.xlu0 %v1485
    %v1487 = vpop.xlane.xlu0 %1486
    %v1488 = vsel %vm164, %v1398, -inf
    %1489 = vmax.xlane.f32.xlu0 %v1488
    %v1490 = vpop.xlane.xlu0 %1489
    %v1491 = vsel %vm164, %v1399, -inf
    %1492 = vmax.xlane.f32.xlu0 %v1491
    %v1493 = vpop.xlane.xlu0 %1492
    %v1494 = vsel %vm164, %v1400, -inf
    %1495 = vmax.xlane.f32.xlu0 %v1494
    %v1496 = vpop.xlane.xlu0 %1495
    %v1497 = vsub.f32 %v1369, %v1403
    %v1498 = vsub.f32 %v1370, %v1406
    %v1499 = vsub.f32 %v1371, %v1409
    %v1500 = vsub.f32 %v1372, %v1412
    %v1501 = vsub.f32 %v1373, %v1415
    %v1502 = vsub.f32 %v1374, %v1418
    %v1503 = vsub.f32 %v1375, %v1421
    %v1504 = vsub.f32 %v1376, %v1424
    %v1505 = vsub.f32 %v1377, %v1427
    %v1506 = vsub.f32 %v1378, %v1430
    %v1507 = vsub.f32 %v1379, %v1433
    %v1508 = vsub.f32 %v1380, %v1436
    %v1509 = vsub.f32 %v1381, %v1439
    %v1510 = vsub.f32 %v1382, %v1442
    %v1511 = vsub.f32 %v1383, %v1445
    %v1512 = vsub.f32 %v1384, %v1448
    %v1513 = vsub.f32 %v1385, %v1451
    %v1514 = vsub.f32 %v1386, %v1454
    %v1515 = vsub.f32 %v1387, %v1457
    %v1516 = vsub.f32 %v1388, %v1460
    %v1517 = vsub.f32 %v1389, %v1463
    %v1518 = vsub.f32 %v1390, %v1466
    %v1519 = vsub.f32 %v1391, %v1469
    %v1520 = vsub.f32 %v1392, %v1472
    %v1521 = vsub.f32 %v1393, %v1475
    %v1522 = vsub.f32 %v1394, %v1478
    %v1523 = vsub.f32 %v1395, %v1481
    %v1524 = vsub.f32 %v1396, %v1484
    %v1525 = vsub.f32 %v1397, %v1487
    %v1526 = vsub.f32 %v1398, %v1490
    %v1527 = vsub.f32 %v1399, %v1493
    %v1528 = vsub.f32 %v1400, %v1496
    %v1529 = vmul.f32 %v1497, 1.442695
    %v1530 = vpow.pop %v1529
    %v1531 = vmul.f32 %v1498, 1.442695
    %v1532 = vpow.pop %v1531
    %v1533 = vmul.f32 %v1499, 1.442695
    %v1534 = vpow.pop %v1533
    %v1535 = vmul.f32 %v1500, 1.442695
    %v1536 = vpow.pop %v1535
    %v1537 = vmul.f32 %v1501, 1.442695
    %v1538 = vpow.pop %v1537
    %v1539 = vmul.f32 %v1502, 1.442695
    %v1540 = vpow.pop %v1539
    %v1541 = vmul.f32 %v1503, 1.442695
    %v1542 = vpow.pop %v1541
    %v1543 = vmul.f32 %v1504, 1.442695
    %v1544 = vpow.pop %v1543
    %v1545 = vmul.f32 %v1505, 1.442695
    %v1546 = vpow.pop %v1545
    %v1547 = vmul.f32 %v1506, 1.442695
    %v1548 = vpow.pop %v1547
    %v1549 = vmul.f32 %v1507, 1.442695
    %v1550 = vpow.pop %v1549
    %v1551 = vmul.f32 %v1508, 1.442695
    %v1552 = vpow.pop %v1551
    %v1553 = vmul.f32 %v1509, 1.442695
    %v1554 = vpow.pop %v1553
    %v1555 = vmul.f32 %v1510, 1.442695
    %v1556 = vpow.pop %v1555
    %v1557 = vmul.f32 %v1511, 1.442695
    %v1558 = vpow.pop %v1557
    %v1559 = vmul.f32 %v1512, 1.442695
    %v1560 = vpow.pop %v1559
    %v1561 = vmul.f32 %v1513, 1.442695
    %v1562 = vpow.pop %v1561
    %v1563 = vmul.f32 %v1514, 1.442695
    %v1564 = vpow.pop %v1563
    %v1565 = vmul.f32 %v1515, 1.442695
    %v1566 = vpow.pop %v1565
    %v1567 = vmul.f32 %v1516, 1.442695
    %v1568 = vpow.pop %v1567
    %v1569 = vmul.f32 %v1517, 1.442695
    %v1570 = vpow.pop %v1569
    %v1571 = vmul.f32 %v1518, 1.442695
    %v1572 = vpow.pop %v1571
    %v1573 = vmul.f32 %v1519, 1.442695
    %v1574 = vpow.pop %v1573
    %v1575 = vmul.f32 %v1520, 1.442695
    %v1576 = vpow.pop %v1575
    %v1577 = vmul.f32 %v1521, 1.442695
    %v1578 = vpow.pop %v1577
    %v1579 = vmul.f32 %v1522, 1.442695
    %v1580 = vpow.pop %v1579
    %v1581 = vmul.f32 %v1523, 1.442695
    %v1582 = vpow.pop %v1581
    %v1583 = vmul.f32 %v1524, 1.442695
    %v1584 = vpow.pop %v1583
    %v1585 = vmul.f32 %v1525, 1.442695
    %v1586 = vpow.pop %v1585
    %v1587 = vmul.f32 %v1526, 1.442695
    %v1588 = vpow.pop %v1587
    %v1589 = vmul.f32 %v1527, 1.442695
    %v1590 = vpow.pop %v1589
    %v1591 = vmul.f32 %v1528, 1.442695
    %v1592 = vpow.pop %v1591
    %v1593 = vsel %vm164, %v1530, 0.0
    %1594 = vadd.xlane.f32.xlu0 %v1593
    %v1595 = vpop.xlane.xlu0 %1594
    %v1596 = vsel %vm164, %v1532, 0.0
    %1597 = vadd.xlane.f32.xlu0 %v1596
    %v1598 = vpop.xlane.xlu0 %1597
    %v1599 = vsel %vm164, %v1534, 0.0
    %1600 = vadd.xlane.f32.xlu0 %v1599
    %v1601 = vpop.xlane.xlu0 %1600
    %v1602 = vsel %vm164, %v1536, 0.0
    %1603 = vadd.xlane.f32.xlu0 %v1602
    %v1604 = vpop.xlane.xlu0 %1603
    %v1605 = vsel %vm164, %v1538, 0.0
    %1606 = vadd.xlane.f32.xlu0 %v1605
    %v1607 = vpop.xlane.xlu0 %1606
    %v1608 = vsel %vm164, %v1540, 0.0
    %1609 = vadd.xlane.f32.xlu0 %v1608
    %v1610 = vpop.xlane.xlu0 %1609
    %v1611 = vsel %vm164, %v1542, 0.0
    %1612 = vadd.xlane.f32.xlu0 %v1611
    %v1613 = vpop.xlane.xlu0 %1612
    %v1614 = vsel %vm164, %v1544, 0.0
    %1615 = vadd.xlane.f32.xlu0 %v1614
    %v1616 = vpop.xlane.xlu0 %1615
    %v1617 = vsel %vm164, %v1546, 0.0
    %1618 = vadd.xlane.f32.xlu0 %v1617
    %v1619 = vpop.xlane.xlu0 %1618
    %v1620 = vsel %vm164, %v1548, 0.0
    %1621 = vadd.xlane.f32.xlu0 %v1620
    %v1622 = vpop.xlane.xlu0 %1621
    %v1623 = vsel %vm164, %v1550, 0.0
    %1624 = vadd.xlane.f32.xlu0 %v1623
    %v1625 = vpop.xlane.xlu0 %1624
    %v1626 = vsel %vm164, %v1552, 0.0
    %1627 = vadd.xlane.f32.xlu0 %v1626
    %v1628 = vpop.xlane.xlu0 %1627
    %v1629 = vsel %vm164, %v1554, 0.0
    %1630 = vadd.xlane.f32.xlu0 %v1629
    %v1631 = vpop.xlane.xlu0 %1630
    %v1632 = vsel %vm164, %v1556, 0.0
    %1633 = vadd.xlane.f32.xlu0 %v1632
    %v1634 = vpop.xlane.xlu0 %1633
    %v1635 = vsel %vm164, %v1558, 0.0
    %1636 = vadd.xlane.f32.xlu0 %v1635
    %v1637 = vpop.xlane.xlu0 %1636
    %v1638 = vsel %vm164, %v1560, 0.0
    %1639 = vadd.xlane.f32.xlu0 %v1638
    %v1640 = vpop.xlane.xlu0 %1639
    %v1641 = vsel %vm164, %v1562, 0.0
    %1642 = vadd.xlane.f32.xlu0 %v1641
    %v1643 = vpop.xlane.xlu0 %1642
    %v1644 = vsel %vm164, %v1564, 0.0
    %1645 = vadd.xlane.f32.xlu0 %v1644
    %v1646 = vpop.xlane.xlu0 %1645
    %v1647 = vsel %vm164, %v1566, 0.0
    %1648 = vadd.xlane.f32.xlu0 %v1647
    %v1649 = vpop.xlane.xlu0 %1648
    %v1650 = vsel %vm164, %v1568, 0.0
    %1651 = vadd.xlane.f32.xlu0 %v1650
    %v1652 = vpop.xlane.xlu0 %1651
    %v1653 = vsel %vm164, %v1570, 0.0
    %1654 = vadd.xlane.f32.xlu0 %v1653
    %v1655 = vpop.xlane.xlu0 %1654
    %v1656 = vsel %vm164, %v1572, 0.0
    %1657 = vadd.xlane.f32.xlu0 %v1656
    %v1658 = vpop.xlane.xlu0 %1657
    %v1659 = vsel %vm164, %v1574, 0.0
    %1660 = vadd.xlane.f32.xlu0 %v1659
    %v1661 = vpop.xlane.xlu0 %1660
    %v1662 = vsel %vm164, %v1576, 0.0
    %1663 = vadd.xlane.f32.xlu0 %v1662
    %v1664 = vpop.xlane.xlu0 %1663
    %v1665 = vsel %vm164, %v1578, 0.0
    %1666 = vadd.xlane.f32.xlu0 %v1665
    %v1667 = vpop.xlane.xlu0 %1666
    %v1668 = vsel %vm164, %v1580, 0.0
    %1669 = vadd.xlane.f32.xlu0 %v1668
    %v1670 = vpop.xlane.xlu0 %1669
    %v1671 = vsel %vm164, %v1582, 0.0
    %1672 = vadd.xlane.f32.xlu0 %v1671
    %v1673 = vpop.xlane.xlu0 %1672
    %v1674 = vsel %vm164, %v1584, 0.0
    %1675 = vadd.xlane.f32.xlu0 %v1674
    %v1676 = vpop.xlane.xlu0 %1675
    %v1677 = vsel %vm164, %v1586, 0.0
    %1678 = vadd.xlane.f32.xlu0 %v1677
    %v1679 = vpop.xlane.xlu0 %1678
    %v1680 = vsel %vm164, %v1588, 0.0
    %1681 = vadd.xlane.f32.xlu0 %v1680
    %v1682 = vpop.xlane.xlu0 %1681
    %v1683 = vsel %vm164, %v1590, 0.0
    %1684 = vadd.xlane.f32.xlu0 %v1683
    %v1685 = vpop.xlane.xlu0 %1684
    %v1686 = vsel %vm164, %v1592, 0.0
    %1687 = vadd.xlane.f32.xlu0 %v1686
    %v1688 = vpop.xlane.xlu0 %1687
    %v1689 = vrcp.pop %v1595
    %v1690 = vmul.f32 %v1595, %v1689
    %v1691 = vsub.f32 1.0, %v1690
    %v1692 = vmul.f32 %v1689, %v1691
    %v1693 = vadd.f32 %v1689, %v1692
    %vm1694 = vweird.f32 %v1595
    %vm1695 = vweird.f32 %v1689
    %vm1696 = vmor %vm1694, %vm1695
    %v1697 = vsel %vm1696, %v1689, %v1693
    %v1698 = vand.u32 2147483647, %v1595
    %vm1699 = vcmp.eq.f32.partialorder %v1698, 8.507059e+37
    %v1700 = vand.u32 %v1595, 2147483648
    %v1701 = vor.u32 1.1754944e-38, %v1700
    %v1702 = vsel %vm1699, %v1701, %v1697
    %v1703 = vmul.f32 %v1530, %v1702
    %v1704 = vrcp.pop %v1598
    %v1705 = vmul.f32 %v1598, %v1704
    %v1706 = vsub.f32 1.0, %v1705
    %v1707 = vmul.f32 %v1704, %v1706
    %v1708 = vadd.f32 %v1704, %v1707
    %vm1709 = vweird.f32 %v1598
    %vm1710 = vweird.f32 %v1704
    %vm1711 = vmor %vm1709, %vm1710
    %v1712 = vsel %vm1711, %v1704, %v1708
    %v1713 = vand.u32 2147483647, %v1598
    %vm1714 = vcmp.eq.f32.partialorder %v1713, 8.507059e+37
    %v1715 = vand.u32 %v1598, 2147483648
    %v1716 = vor.u32 1.1754944e-38, %v1715
    %v1717 = vsel %vm1714, %v1716, %v1712
    %v1718 = vmul.f32 %v1532, %v1717
    %v1719 = vrcp.pop %v1601
    %v1720 = vmul.f32 %v1601, %v1719
    %v1721 = vsub.f32 1.0, %v1720
    %v1722 = vmul.f32 %v1719, %v1721
    %v1723 = vadd.f32 %v1719, %v1722
    %vm1724 = vweird.f32 %v1601
    %vm1725 = vweird.f32 %v1719
    %vm1726 = vmor %vm1724, %vm1725
    %v1727 = vsel %vm1726, %v1719, %v1723
    %v1728 = vand.u32 2147483647, %v1601
    %vm1729 = vcmp.eq.f32.partialorder %v1728, 8.507059e+37
    %v1730 = vand.u32 %v1601, 2147483648
    %v1731 = vor.u32 1.1754944e-38, %v1730
    %v1732 = vsel %vm1729, %v1731, %v1727
    %v1733 = vmul.f32 %v1534, %v1732
    %v1734 = vrcp.pop %v1604
    %v1735 = vmul.f32 %v1604, %v1734
    %v1736 = vsub.f32 1.0, %v1735
    %v1737 = vmul.f32 %v1734, %v1736
    %v1738 = vadd.f32 %v1734, %v1737
    %vm1739 = vweird.f32 %v1604
    %vm1740 = vweird.f32 %v1734
    %vm1741 = vmor %vm1739, %vm1740
    %v1742 = vsel %vm1741, %v1734, %v1738
    %v1743 = vand.u32 2147483647, %v1604
    %vm1744 = vcmp.eq.f32.partialorder %v1743, 8.507059e+37
    %v1745 = vand.u32 %v1604, 2147483648
    %v1746 = vor.u32 1.1754944e-38, %v1745
    %v1747 = vsel %vm1744, %v1746, %v1742
    %v1748 = vmul.f32 %v1536, %v1747
    %v1749 = vrcp.pop %v1607
    %v1750 = vmul.f32 %v1607, %v1749
    %v1751 = vsub.f32 1.0, %v1750
    %v1752 = vmul.f32 %v1749, %v1751
    %v1753 = vadd.f32 %v1749, %v1752
    %vm1754 = vweird.f32 %v1607
    %vm1755 = vweird.f32 %v1749
    %vm1756 = vmor %vm1754, %vm1755
    %v1757 = vsel %vm1756, %v1749, %v1753
    %v1758 = vand.u32 2147483647, %v1607
    %vm1759 = vcmp.eq.f32.partialorder %v1758, 8.507059e+37
    %v1760 = vand.u32 %v1607, 2147483648
    %v1761 = vor.u32 1.1754944e-38, %v1760
    %v1762 = vsel %vm1759, %v1761, %v1757
    %v1763 = vmul.f32 %v1538, %v1762
    %v1764 = vrcp.pop %v1610
    %v1765 = vmul.f32 %v1610, %v1764
    %v1766 = vsub.f32 1.0, %v1765
    %v1767 = vmul.f32 %v1764, %v1766
    %v1768 = vadd.f32 %v1764, %v1767
    %vm1769 = vweird.f32 %v1610
    %vm1770 = vweird.f32 %v1764
    %vm1771 = vmor %vm1769, %vm1770
    %v1772 = vsel %vm1771, %v1764, %v1768
    %v1773 = vand.u32 2147483647, %v1610
    %vm1774 = vcmp.eq.f32.partialorder %v1773, 8.507059e+37
    %v1775 = vand.u32 %v1610, 2147483648
    %v1776 = vor.u32 1.1754944e-38, %v1775
    %v1777 = vsel %vm1774, %v1776, %v1772
    %v1778 = vmul.f32 %v1540, %v1777
    %v1779 = vrcp.pop %v1613
    %v1780 = vmul.f32 %v1613, %v1779
    %v1781 = vsub.f32 1.0, %v1780
    %v1782 = vmul.f32 %v1779, %v1781
    %v1783 = vadd.f32 %v1779, %v1782
    %vm1784 = vweird.f32 %v1613
    %vm1785 = vweird.f32 %v1779
    %vm1786 = vmor %vm1784, %vm1785
    %v1787 = vsel %vm1786, %v1779, %v1783
    %v1788 = vand.u32 2147483647, %v1613
    %vm1789 = vcmp.eq.f32.partialorder %v1788, 8.507059e+37
    %v1790 = vand.u32 %v1613, 2147483648
    %v1791 = vor.u32 1.1754944e-38, %v1790
    %v1792 = vsel %vm1789, %v1791, %v1787
    %v1793 = vmul.f32 %v1542, %v1792
    %v1794 = vrcp.pop %v1616
    %v1795 = vmul.f32 %v1616, %v1794
    %v1796 = vsub.f32 1.0, %v1795
    %v1797 = vmul.f32 %v1794, %v1796
    %v1798 = vadd.f32 %v1794, %v1797
    %vm1799 = vweird.f32 %v1616
    %vm1800 = vweird.f32 %v1794
    %vm1801 = vmor %vm1799, %vm1800
    %v1802 = vsel %vm1801, %v1794, %v1798
    %v1803 = vand.u32 2147483647, %v1616
    %vm1804 = vcmp.eq.f32.partialorder %v1803, 8.507059e+37
    %v1805 = vand.u32 %v1616, 2147483648
    %v1806 = vor.u32 1.1754944e-38, %v1805
    %v1807 = vsel %vm1804, %v1806, %v1802
    %v1808 = vmul.f32 %v1544, %v1807
    %v1809 = vrcp.pop %v1619
    %v1810 = vmul.f32 %v1619, %v1809
    %v1811 = vsub.f32 1.0, %v1810
    %v1812 = vmul.f32 %v1809, %v1811
    %v1813 = vadd.f32 %v1809, %v1812
    %vm1814 = vweird.f32 %v1619
    %vm1815 = vweird.f32 %v1809
    %vm1816 = vmor %vm1814, %vm1815
    %v1817 = vsel %vm1816, %v1809, %v1813
    %v1818 = vand.u32 2147483647, %v1619
    %vm1819 = vcmp.eq.f32.partialorder %v1818, 8.507059e+37
    %v1820 = vand.u32 %v1619, 2147483648
    %v1821 = vor.u32 1.1754944e-38, %v1820
    %v1822 = vsel %vm1819, %v1821, %v1817
    %v1823 = vmul.f32 %v1546, %v1822
    %v1824 = vrcp.pop %v1622
    %v1825 = vmul.f32 %v1622, %v1824
    %v1826 = vsub.f32 1.0, %v1825
    %v1827 = vmul.f32 %v1824, %v1826
    %v1828 = vadd.f32 %v1824, %v1827
    %vm1829 = vweird.f32 %v1622
    %vm1830 = vweird.f32 %v1824
    %vm1831 = vmor %vm1829, %vm1830
    %v1832 = vsel %vm1831, %v1824, %v1828
    %v1833 = vand.u32 2147483647, %v1622
    %vm1834 = vcmp.eq.f32.partialorder %v1833, 8.507059e+37
    %v1835 = vand.u32 %v1622, 2147483648
    %v1836 = vor.u32 1.1754944e-38, %v1835
    %v1837 = vsel %vm1834, %v1836, %v1832
    %v1838 = vmul.f32 %v1548, %v1837
    %v1839 = vrcp.pop %v1625
    %v1840 = vmul.f32 %v1625, %v1839
    %v1841 = vsub.f32 1.0, %v1840
    %v1842 = vmul.f32 %v1839, %v1841
    %v1843 = vadd.f32 %v1839, %v1842
    %vm1844 = vweird.f32 %v1625
    %vm1845 = vweird.f32 %v1839
    %vm1846 = vmor %vm1844, %vm1845
    %v1847 = vsel %vm1846, %v1839, %v1843
    %v1848 = vand.u32 2147483647, %v1625
    %vm1849 = vcmp.eq.f32.partialorder %v1848, 8.507059e+37
    %v1850 = vand.u32 %v1625, 2147483648
    %v1851 = vor.u32 1.1754944e-38, %v1850
    %v1852 = vsel %vm1849, %v1851, %v1847
    %v1853 = vmul.f32 %v1550, %v1852
    %v1854 = vrcp.pop %v1628
    %v1855 = vmul.f32 %v1628, %v1854
    %v1856 = vsub.f32 1.0, %v1855
    %v1857 = vmul.f32 %v1854, %v1856
    %v1858 = vadd.f32 %v1854, %v1857
    %vm1859 = vweird.f32 %v1628
    %vm1860 = vweird.f32 %v1854
    %vm1861 = vmor %vm1859, %vm1860
    %v1862 = vsel %vm1861, %v1854, %v1858
    %v1863 = vand.u32 2147483647, %v1628
    %vm1864 = vcmp.eq.f32.partialorder %v1863, 8.507059e+37
    %v1865 = vand.u32 %v1628, 2147483648
    %v1866 = vor.u32 1.1754944e-38, %v1865
    %v1867 = vsel %vm1864, %v1866, %v1862
    %v1868 = vmul.f32 %v1552, %v1867
    %v1869 = vrcp.pop %v1631
    %v1870 = vmul.f32 %v1631, %v1869
    %v1871 = vsub.f32 1.0, %v1870
    %v1872 = vmul.f32 %v1869, %v1871
    %v1873 = vadd.f32 %v1869, %v1872
    %vm1874 = vweird.f32 %v1631
    %vm1875 = vweird.f32 %v1869
    %vm1876 = vmor %vm1874, %vm1875
    %v1877 = vsel %vm1876, %v1869, %v1873
    %v1878 = vand.u32 2147483647, %v1631
    %vm1879 = vcmp.eq.f32.partialorder %v1878, 8.507059e+37
    %v1880 = vand.u32 %v1631, 2147483648
    %v1881 = vor.u32 1.1754944e-38, %v1880
    %v1882 = vsel %vm1879, %v1881, %v1877
    %v1883 = vmul.f32 %v1554, %v1882
    %v1884 = vrcp.pop %v1634
    %v1885 = vmul.f32 %v1634, %v1884
    %v1886 = vsub.f32 1.0, %v1885
    %v1887 = vmul.f32 %v1884, %v1886
    %v1888 = vadd.f32 %v1884, %v1887
    %vm1889 = vweird.f32 %v1634
    %vm1890 = vweird.f32 %v1884
    %vm1891 = vmor %vm1889, %vm1890
    %v1892 = vsel %vm1891, %v1884, %v1888
    %v1893 = vand.u32 2147483647, %v1634
    %vm1894 = vcmp.eq.f32.partialorder %v1893, 8.507059e+37
    %v1895 = vand.u32 %v1634, 2147483648
    %v1896 = vor.u32 1.1754944e-38, %v1895
    %v1897 = vsel %vm1894, %v1896, %v1892
    %v1898 = vmul.f32 %v1556, %v1897
    %v1899 = vrcp.pop %v1637
    %v1900 = vmul.f32 %v1637, %v1899
    %v1901 = vsub.f32 1.0, %v1900
    %v1902 = vmul.f32 %v1899, %v1901
    %v1903 = vadd.f32 %v1899, %v1902
    %vm1904 = vweird.f32 %v1637
    %vm1905 = vweird.f32 %v1899
    %vm1906 = vmor %vm1904, %vm1905
    %v1907 = vsel %vm1906, %v1899, %v1903
    %v1908 = vand.u32 2147483647, %v1637
    %vm1909 = vcmp.eq.f32.partialorder %v1908, 8.507059e+37
    %v1910 = vand.u32 %v1637, 2147483648
    %v1911 = vor.u32 1.1754944e-38, %v1910
    %v1912 = vsel %vm1909, %v1911, %v1907
    %v1913 = vmul.f32 %v1558, %v1912
    %v1914 = vrcp.pop %v1640
    %v1915 = vmul.f32 %v1640, %v1914
    %v1916 = vsub.f32 1.0, %v1915
    %v1917 = vmul.f32 %v1914, %v1916
    %v1918 = vadd.f32 %v1914, %v1917
    %vm1919 = vweird.f32 %v1640
    %vm1920 = vweird.f32 %v1914
    %vm1921 = vmor %vm1919, %vm1920
    %v1922 = vsel %vm1921, %v1914, %v1918
    %v1923 = vand.u32 2147483647, %v1640
    %vm1924 = vcmp.eq.f32.partialorder %v1923, 8.507059e+37
    %v1925 = vand.u32 %v1640, 2147483648
    %v1926 = vor.u32 1.1754944e-38, %v1925
    %v1927 = vsel %vm1924, %v1926, %v1922
    %v1928 = vmul.f32 %v1560, %v1927
    %v1929 = vrcp.pop %v1643
    %v1930 = vmul.f32 %v1643, %v1929
    %v1931 = vsub.f32 1.0, %v1930
    %v1932 = vmul.f32 %v1929, %v1931
    %v1933 = vadd.f32 %v1929, %v1932
    %vm1934 = vweird.f32 %v1643
    %vm1935 = vweird.f32 %v1929
    %vm1936 = vmor %vm1934, %vm1935
    %v1937 = vsel %vm1936, %v1929, %v1933
    %v1938 = vand.u32 2147483647, %v1643
    %vm1939 = vcmp.eq.f32.partialorder %v1938, 8.507059e+37
    %v1940 = vand.u32 %v1643, 2147483648
    %v1941 = vor.u32 1.1754944e-38, %v1940
    %v1942 = vsel %vm1939, %v1941, %v1937
    %v1943 = vmul.f32 %v1562, %v1942
    %v1944 = vrcp.pop %v1646
    %v1945 = vmul.f32 %v1646, %v1944
    %v1946 = vsub.f32 1.0, %v1945
    %v1947 = vmul.f32 %v1944, %v1946
    %v1948 = vadd.f32 %v1944, %v1947
    %vm1949 = vweird.f32 %v1646
    %vm1950 = vweird.f32 %v1944
    %vm1951 = vmor %vm1949, %vm1950
    %v1952 = vsel %vm1951, %v1944, %v1948
    %v1953 = vand.u32 2147483647, %v1646
    %vm1954 = vcmp.eq.f32.partialorder %v1953, 8.507059e+37
    %v1955 = vand.u32 %v1646, 2147483648
    %v1956 = vor.u32 1.1754944e-38, %v1955
    %v1957 = vsel %vm1954, %v1956, %v1952
    %v1958 = vmul.f32 %v1564, %v1957
    %v1959 = vrcp.pop %v1649
    %v1960 = vmul.f32 %v1649, %v1959
    %v1961 = vsub.f32 1.0, %v1960
    %v1962 = vmul.f32 %v1959, %v1961
    %v1963 = vadd.f32 %v1959, %v1962
    %vm1964 = vweird.f32 %v1649
    %vm1965 = vweird.f32 %v1959
    %vm1966 = vmor %vm1964, %vm1965
    %v1967 = vsel %vm1966, %v1959, %v1963
    %v1968 = vand.u32 2147483647, %v1649
    %vm1969 = vcmp.eq.f32.partialorder %v1968, 8.507059e+37
    %v1970 = vand.u32 %v1649, 2147483648
    %v1971 = vor.u32 1.1754944e-38, %v1970
    %v1972 = vsel %vm1969, %v1971, %v1967
    %v1973 = vmul.f32 %v1566, %v1972
    %v1974 = vrcp.pop %v1652
    %v1975 = vmul.f32 %v1652, %v1974
    %v1976 = vsub.f32 1.0, %v1975
    %v1977 = vmul.f32 %v1974, %v1976
    %v1978 = vadd.f32 %v1974, %v1977
    %vm1979 = vweird.f32 %v1652
    %vm1980 = vweird.f32 %v1974
    %vm1981 = vmor %vm1979, %vm1980
    %v1982 = vsel %vm1981, %v1974, %v1978
    %v1983 = vand.u32 2147483647, %v1652
    %vm1984 = vcmp.eq.f32.partialorder %v1983, 8.507059e+37
    %v1985 = vand.u32 %v1652, 2147483648
    %v1986 = vor.u32 1.1754944e-38, %v1985
    %v1987 = vsel %vm1984, %v1986, %v1982
    %v1988 = vmul.f32 %v1568, %v1987
    %v1989 = vrcp.pop %v1655
    %v1990 = vmul.f32 %v1655, %v1989
    %v1991 = vsub.f32 1.0, %v1990
    %v1992 = vmul.f32 %v1989, %v1991
    %v1993 = vadd.f32 %v1989, %v1992
    %vm1994 = vweird.f32 %v1655
    %vm1995 = vweird.f32 %v1989
    %vm1996 = vmor %vm1994, %vm1995
    %v1997 = vsel %vm1996, %v1989, %v1993
    %v1998 = vand.u32 2147483647, %v1655
    %vm1999 = vcmp.eq.f32.partialorder %v1998, 8.507059e+37
    %v2000 = vand.u32 %v1655, 2147483648
    %v2001 = vor.u32 1.1754944e-38, %v2000
    %v2002 = vsel %vm1999, %v2001, %v1997
    %v2003 = vmul.f32 %v1570, %v2002
    %v2004 = vrcp.pop %v1658
    %v2005 = vmul.f32 %v1658, %v2004
    %v2006 = vsub.f32 1.0, %v2005
    %v2007 = vmul.f32 %v2004, %v2006
    %v2008 = vadd.f32 %v2004, %v2007
    %vm2009 = vweird.f32 %v1658
    %vm2010 = vweird.f32 %v2004
    %vm2011 = vmor %vm2009, %vm2010
    %v2012 = vsel %vm2011, %v2004, %v2008
    %v2013 = vand.u32 2147483647, %v1658
    %vm2014 = vcmp.eq.f32.partialorder %v2013, 8.507059e+37
    %v2015 = vand.u32 %v1658, 2147483648
    %v2016 = vor.u32 1.1754944e-38, %v2015
    %v2017 = vsel %vm2014, %v2016, %v2012
    %v2018 = vmul.f32 %v1572, %v2017
    %v2019 = vrcp.pop %v1661
    %v2020 = vmul.f32 %v1661, %v2019
    %v2021 = vsub.f32 1.0, %v2020
    %v2022 = vmul.f32 %v2019, %v2021
    %v2023 = vadd.f32 %v2019, %v2022
    %vm2024 = vweird.f32 %v1661
    %vm2025 = vweird.f32 %v2019
    %vm2026 = vmor %vm2024, %vm2025
    %v2027 = vsel %vm2026, %v2019, %v2023
    %v2028 = vand.u32 2147483647, %v1661
    %vm2029 = vcmp.eq.f32.partialorder %v2028, 8.507059e+37
    %v2030 = vand.u32 %v1661, 2147483648
    %v2031 = vor.u32 1.1754944e-38, %v2030
    %v2032 = vsel %vm2029, %v2031, %v2027
    %v2033 = vmul.f32 %v1574, %v2032
    %v2034 = vrcp.pop %v1664
    %v2035 = vmul.f32 %v1664, %v2034
    %v2036 = vsub.f32 1.0, %v2035
    %v2037 = vmul.f32 %v2034, %v2036
    %v2038 = vadd.f32 %v2034, %v2037
    %vm2039 = vweird.f32 %v1664
    %vm2040 = vweird.f32 %v2034
    %vm2041 = vmor %vm2039, %vm2040
    %v2042 = vsel %vm2041, %v2034, %v2038
    %v2043 = vand.u32 2147483647, %v1664
    %vm2044 = vcmp.eq.f32.partialorder %v2043, 8.507059e+37
    %v2045 = vand.u32 %v1664, 2147483648
    %v2046 = vor.u32 1.1754944e-38, %v2045
    %v2047 = vsel %vm2044, %v2046, %v2042
    %v2048 = vmul.f32 %v1576, %v2047
    %v2049 = vrcp.pop %v1667
    %v2050 = vmul.f32 %v1667, %v2049
    %v2051 = vsub.f32 1.0, %v2050
    %v2052 = vmul.f32 %v2049, %v2051
    %v2053 = vadd.f32 %v2049, %v2052
    %vm2054 = vweird.f32 %v1667
    %vm2055 = vweird.f32 %v2049
    %vm2056 = vmor %vm2054, %vm2055
    %v2057 = vsel %vm2056, %v2049, %v2053
    %v2058 = vand.u32 2147483647, %v1667
    %vm2059 = vcmp.eq.f32.partialorder %v2058, 8.507059e+37
    %v2060 = vand.u32 %v1667, 2147483648
    %v2061 = vor.u32 1.1754944e-38, %v2060
    %v2062 = vsel %vm2059, %v2061, %v2057
    %v2063 = vmul.f32 %v1578, %v2062
    %v2064 = vrcp.pop %v1670
    %v2065 = vmul.f32 %v1670, %v2064
    %v2066 = vsub.f32 1.0, %v2065
    %v2067 = vmul.f32 %v2064, %v2066
    %v2068 = vadd.f32 %v2064, %v2067
    %vm2069 = vweird.f32 %v1670
    %vm2070 = vweird.f32 %v2064
    %vm2071 = vmor %vm2069, %vm2070
    %v2072 = vsel %vm2071, %v2064, %v2068
    %v2073 = vand.u32 2147483647, %v1670
    %vm2074 = vcmp.eq.f32.partialorder %v2073, 8.507059e+37
    %v2075 = vand.u32 %v1670, 2147483648
    %v2076 = vor.u32 1.1754944e-38, %v2075
    %v2077 = vsel %vm2074, %v2076, %v2072
    %v2078 = vmul.f32 %v1580, %v2077
    %v2079 = vrcp.pop %v1673
    %v2080 = vmul.f32 %v1673, %v2079
    %v2081 = vsub.f32 1.0, %v2080
    %v2082 = vmul.f32 %v2079, %v2081
    %v2083 = vadd.f32 %v2079, %v2082
    %vm2084 = vweird.f32 %v1673
    %vm2085 = vweird.f32 %v2079
    %vm2086 = vmor %vm2084, %vm2085
    %v2087 = vsel %vm2086, %v2079, %v2083
    %v2088 = vand.u32 2147483647, %v1673
    %vm2089 = vcmp.eq.f32.partialorder %v2088, 8.507059e+37
    %v2090 = vand.u32 %v1673, 2147483648
    %v2091 = vor.u32 1.1754944e-38, %v2090
    %v2092 = vsel %vm2089, %v2091, %v2087
    %v2093 = vmul.f32 %v1582, %v2092
    %v2094 = vrcp.pop %v1676
    %v2095 = vmul.f32 %v1676, %v2094
    %v2096 = vsub.f32 1.0, %v2095
    %v2097 = vmul.f32 %v2094, %v2096
    %v2098 = vadd.f32 %v2094, %v2097
    %vm2099 = vweird.f32 %v1676
    %vm2100 = vweird.f32 %v2094
    %vm2101 = vmor %vm2099, %vm2100
    %v2102 = vsel %vm2101, %v2094, %v2098
    %v2103 = vand.u32 2147483647, %v1676
    %vm2104 = vcmp.eq.f32.partialorder %v2103, 8.507059e+37
    %v2105 = vand.u32 %v1676, 2147483648
    %v2106 = vor.u32 1.1754944e-38, %v2105
    %v2107 = vsel %vm2104, %v2106, %v2102
    %v2108 = vmul.f32 %v1584, %v2107
    %v2109 = vrcp.pop %v1679
    %v2110 = vmul.f32 %v1679, %v2109
    %v2111 = vsub.f32 1.0, %v2110
    %v2112 = vmul.f32 %v2109, %v2111
    %v2113 = vadd.f32 %v2109, %v2112
    %vm2114 = vweird.f32 %v1679
    %vm2115 = vweird.f32 %v2109
    %vm2116 = vmor %vm2114, %vm2115
    %v2117 = vsel %vm2116, %v2109, %v2113
    %v2118 = vand.u32 2147483647, %v1679
    %vm2119 = vcmp.eq.f32.partialorder %v2118, 8.507059e+37
    %v2120 = vand.u32 %v1679, 2147483648
    %v2121 = vor.u32 1.1754944e-38, %v2120
    %v2122 = vsel %vm2119, %v2121, %v2117
    %v2123 = vmul.f32 %v1586, %v2122
    %v2124 = vrcp.pop %v1682
    %v2125 = vmul.f32 %v1682, %v2124
    %v2126 = vsub.f32 1.0, %v2125
    %v2127 = vmul.f32 %v2124, %v2126
    %v2128 = vadd.f32 %v2124, %v2127
    %vm2129 = vweird.f32 %v1682
    %vm2130 = vweird.f32 %v2124
    %vm2131 = vmor %vm2129, %vm2130
    %v2132 = vsel %vm2131, %v2124, %v2128
    %v2133 = vand.u32 2147483647, %v1682
    %vm2134 = vcmp.eq.f32.partialorder %v2133, 8.507059e+37
    %v2135 = vand.u32 %v1682, 2147483648
    %v2136 = vor.u32 1.1754944e-38, %v2135
    %v2137 = vsel %vm2134, %v2136, %v2132
    %v2138 = vmul.f32 %v1588, %v2137
    %v2139 = vrcp.pop %v1685
    %v2140 = vmul.f32 %v1685, %v2139
    %v2141 = vsub.f32 1.0, %v2140
    %v2142 = vmul.f32 %v2139, %v2141
    %v2143 = vadd.f32 %v2139, %v2142
    %vm2144 = vweird.f32 %v1685
    %vm2145 = vweird.f32 %v2139
    %vm2146 = vmor %vm2144, %vm2145
    %v2147 = vsel %vm2146, %v2139, %v2143
    %v2148 = vand.u32 2147483647, %v1685
    %vm2149 = vcmp.eq.f32.partialorder %v2148, 8.507059e+37
    %v2150 = vand.u32 %v1685, 2147483648
    %v2151 = vor.u32 1.1754944e-38, %v2150
    %v2152 = vsel %vm2149, %v2151, %v2147
    %v2153 = vmul.f32 %v1590, %v2152
    %v2154 = vrcp.pop %v1688
    %v2155 = vmul.f32 %v1688, %v2154
    %v2156 = vsub.f32 1.0, %v2155
    %v2157 = vmul.f32 %v2154, %v2156
    %v2158 = vadd.f32 %v2154, %v2157
    %vm2159 = vweird.f32 %v1688
    %vm2160 = vweird.f32 %v2154
    %vm2161 = vmor %vm2159, %vm2160
    %v2162 = vsel %vm2161, %v2154, %v2158
    %v2163 = vand.u32 2147483647, %v1688
    %vm2164 = vcmp.eq.f32.partialorder %v2163, 8.507059e+37
    %v2165 = vand.u32 %v1688, 2147483648
    %v2166 = vor.u32 1.1754944e-38, %v2165
    %v2167 = vsel %vm2164, %v2166, %v2162
    %v2168 = vmul.f32 %v1592, %v2167
    %v2169 = vadd.f32 %v895, %v1703
    %v2170 = vadd.f32 %v910, %v1718
    %v2171 = vadd.f32 %v925, %v1733
    %v2172 = vadd.f32 %v940, %v1748
    %v2173 = vadd.f32 %v955, %v1763
    %v2174 = vadd.f32 %v970, %v1778
    %v2175 = vadd.f32 %v985, %v1793
    %v2176 = vadd.f32 %v1000, %v1808
    %v2177 = vadd.f32 %v1015, %v1823
    %v2178 = vadd.f32 %v1030, %v1838
    %v2179 = vadd.f32 %v1045, %v1853
    %v2180 = vadd.f32 %v1060, %v1868
    %v2181 = vadd.f32 %v1075, %v1883
    %v2182 = vadd.f32 %v1090, %v1898
    %v2183 = vadd.f32 %v1105, %v1913
    %v2184 = vadd.f32 %v1120, %v1928
    %v2185 = vadd.f32 %v1135, %v1943
    %v2186 = vadd.f32 %v1150, %v1958
    %v2187 = vadd.f32 %v1165, %v1973
    %v2188 = vadd.f32 %v1180, %v1988
    %v2189 = vadd.f32 %v1195, %v2003
    %v2190 = vadd.f32 %v1210, %v2018
    %v2191 = vadd.f32 %v1225, %v2033
    %v2192 = vadd.f32 %v1240, %v2048
    %v2193 = vadd.f32 %v1255, %v2063
    %v2194 = vadd.f32 %v1270, %v2078
    %v2195 = vadd.f32 %v1285, %v2093
    %v2196 = vadd.f32 %v1300, %v2108
    %v2197 = vadd.f32 %v1315, %v2123
    %v2198 = vadd.f32 %v1330, %v2138
    %v2199 = vadd.f32 %v1345, %v2153
    %v2200 = vadd.f32 %v1360, %v2168
    %v2201 = vpack.c.bf16 %v2169, %v2169
    %v2202 = vpack.c.bf16 %v2170, %v2170
    %v2203 = vpack.c.bf16 %v2171, %v2171
    %v2204 = vpack.c.bf16 %v2172, %v2172
    %v2205 = vpack.c.bf16 %v2173, %v2173
    %v2206 = vpack.c.bf16 %v2174, %v2174
    %v2207 = vpack.c.bf16 %v2175, %v2175
    %v2208 = vpack.c.bf16 %v2176, %v2176
    %v2209 = vpack.c.bf16 %v2177, %v2177
    %v2210 = vpack.c.bf16 %v2178, %v2178
    %v2211 = vpack.c.bf16 %v2179, %v2179
    %v2212 = vpack.c.bf16 %v2180, %v2180
    %v2213 = vpack.c.bf16 %v2181, %v2181
    %v2214 = vpack.c.bf16 %v2182, %v2182
    %v2215 = vpack.c.bf16 %v2183, %v2183
    %v2216 = vpack.c.bf16 %v2184, %v2184
    %v2217 = vpack.c.bf16 %v2185, %v2185
    %v2218 = vpack.c.bf16 %v2186, %v2186
    %v2219 = vpack.c.bf16 %v2187, %v2187
    %v2220 = vpack.c.bf16 %v2188, %v2188
    %v2221 = vpack.c.bf16 %v2189, %v2189
    %v2222 = vpack.c.bf16 %v2190, %v2190
    %v2223 = vpack.c.bf16 %v2191, %v2191
    %v2224 = vpack.c.bf16 %v2192, %v2192
    %v2225 = vpack.c.bf16 %v2193, %v2193
    %v2226 = vpack.c.bf16 %v2194, %v2194
    %v2227 = vpack.c.bf16 %v2195, %v2195
    %v2228 = vpack.c.bf16 %v2196, %v2196
    %v2229 = vpack.c.bf16 %v2197, %v2197
    %v2230 = vpack.c.bf16 %v2198, %v2198
    %v2231 = vpack.c.bf16 %v2199, %v2199
    %v2232 = vpack.c.bf16 %v2200, %v2200
    %v2233 = vld [vmem:[#allocation7] sm:$0xff]
    %v2234 = vld [vmem:[#allocation7 + $0x8] sm:$0xff]
    %v2235 = vld [vmem:[#allocation7 + $0x10] sm:$0xff]
    %v2236 = vld [vmem:[#allocation7 + $0x18] sm:$0xff]
    %v2237 = vld [vmem:[#allocation7 + $0x20] sm:$0xff]
    %v2238 = vld [vmem:[#allocation7 + $0x28] sm:$0xff]
    %v2239 = vld [vmem:[#allocation7 + $0x30] sm:$0xff]
    %v2240 = vld [vmem:[#allocation7 + $0x38] sm:$0xff]
    %v2241 = vld [vmem:[#allocation7 + $0x40] sm:$0xff]
    %v2242 = vld [vmem:[#allocation7 + $0x48] sm:$0xff]
    %v2243 = vld [vmem:[#allocation7 + $0x50] sm:$0xff]
    %v2244 = vld [vmem:[#allocation7 + $0x58] sm:$0xff]
    %v2245 = vld [vmem:[#allocation7 + $0x60] sm:$0xff]
    %v2246 = vld [vmem:[#allocation7 + $0x68] sm:$0xff]
    %v2247 = vld [vmem:[#allocation7 + $0x70] sm:$0xff]
    %v2248 = vld [vmem:[#allocation7 + $0x78] sm:$0xff]
    %v2249 = vld [vmem:[#allocation7 + $0x80] sm:$0xff]
    %v2250 = vld [vmem:[#allocation7 + $0x88] sm:$0xff]
    %v2251 = vld [vmem:[#allocation7 + $0x90] sm:$0xff]
    %v2252 = vld [vmem:[#allocation7 + $0x98] sm:$0xff]
    %v2253 = vld [vmem:[#allocation7 + $0xa0] sm:$0xff]
    %v2254 = vld [vmem:[#allocation7 + $0xa8] sm:$0xff]
    %v2255 = vld [vmem:[#allocation7 + $0xb0] sm:$0xff]
    %v2256 = vld [vmem:[#allocation7 + $0xb8] sm:$0xff]
    %v2257 = vld [vmem:[#allocation7 + $0xc0] sm:$0xff]
    %v2258 = vld [vmem:[#allocation7 + $0xc8] sm:$0xff]
    %v2259 = vld [vmem:[#allocation7 + $0xd0] sm:$0xff]
    %v2260 = vld [vmem:[#allocation7 + $0xd8] sm:$0xff]
    %v2261 = vld [vmem:[#allocation7 + $0xe0] sm:$0xff]
    %v2262 = vld [vmem:[#allocation7 + $0xe8] sm:$0xff]
    %v2263 = vld [vmem:[#allocation7 + $0xf0] sm:$0xff]
    %v2264 = vld [vmem:[#allocation7 + $0xf8] sm:$0xff]
    %v2265 = vpack.c.bf16 %v2233, %v2233
    %v2266 = vpack.c.bf16 %v2234, %v2234
    %v2267 = vpack.c.bf16 %v2235, %v2235
    %v2268 = vpack.c.bf16 %v2236, %v2236
    %v2269 = vpack.c.bf16 %v2237, %v2237
    %v2270 = vpack.c.bf16 %v2238, %v2238
    %v2271 = vpack.c.bf16 %v2239, %v2239
    %v2272 = vpack.c.bf16 %v2240, %v2240
    %v2273 = vpack.c.bf16 %v2241, %v2241
    %v2274 = vpack.c.bf16 %v2242, %v2242
    %v2275 = vpack.c.bf16 %v2243, %v2243
    %v2276 = vpack.c.bf16 %v2244, %v2244
    %v2277 = vpack.c.bf16 %v2245, %v2245
    %v2278 = vpack.c.bf16 %v2246, %v2246
    %v2279 = vpack.c.bf16 %v2247, %v2247
    %v2280 = vpack.c.bf16 %v2248, %v2248
    %v2281 = vpack.c.bf16 %v2249, %v2249
    %v2282 = vpack.c.bf16 %v2250, %v2250
    %v2283 = vpack.c.bf16 %v2251, %v2251
    %v2284 = vpack.c.bf16 %v2252, %v2252
    %v2285 = vpack.c.bf16 %v2253, %v2253
    %v2286 = vpack.c.bf16 %v2254, %v2254
    %v2287 = vpack.c.bf16 %v2255, %v2255
    %v2288 = vpack.c.bf16 %v2256, %v2256
    %v2289 = vpack.c.bf16 %v2257, %v2257
    %v2290 = vpack.c.bf16 %v2258, %v2258
    %v2291 = vpack.c.bf16 %v2259, %v2259
    %v2292 = vpack.c.bf16 %v2260, %v2260
    %v2293 = vpack.c.bf16 %v2261, %v2261
    %v2294 = vpack.c.bf16 %v2262, %v2262
    %v2295 = vpack.c.bf16 %v2263, %v2263
    %v2296 = vpack.c.bf16 %v2264, %v2264
    %v2305 = vunpack.c.l.b16 %v2201
    %v2306 = vunpack.c.l.b16 %v2202
    %v2307 = vunpack.c.l.b16 %v2203
    %v2308 = vunpack.c.l.b16 %v2204
    %v2309 = vunpack.c.l.b16 %v2205
    %v2310 = vunpack.c.l.b16 %v2206
    %v2311 = vunpack.c.l.b16 %v2207
    %v2312 = vunpack.c.l.b16 %v2208
    %v2313 = vpack.c.b16 %v2306, %v2305
    %v2314 = vpack.c.b16 %v2308, %v2307
    %v2315 = vpack.c.b16 %v2310, %v2309
    %v2316 = vpack.c.b16 %v2312, %v2311
    %v2325 = vunpack.c.l.b16 %v2265
    %v2326 = vunpack.c.l.b16 %v2266
    %v2327 = vunpack.c.l.b16 %v2267
    %v2328 = vunpack.c.l.b16 %v2268
    %v2329 = vunpack.c.l.b16 %v2269
    %v2330 = vunpack.c.l.b16 %v2270
    %v2331 = vunpack.c.l.b16 %v2271
    %v2332 = vunpack.c.l.b16 %v2272
    %v2333 = vpack.c.b16 %v2326, %v2325
    %v2334 = vpack.c.b16 %v2328, %v2327
    %v2335 = vpack.c.b16 %v2330, %v2329
    %v2336 = vpack.c.b16 %v2332, %v2331
    %v2342 = vsel %vm164, %v2313, 0
    %v2345 = vsel %vm164, %v2314, 0
    %v2348 = vsel %vm164, %v2315, 0
    %v2351 = vsel %vm164, %v2316, 0
    %2353 = vmatpush.bf16.msra.mxu0 0
    %2354 = vmatpush.bf16.msra.mxu0 0
    %2355 = vmatpush.bf16.msra.mxu0 0
    %2356 = vmatpush.bf16.msra.mxu0 0
    %2357 = vmatpush.bf16.msra.mxu0 %v2336
    %2358 = vmatpush.bf16.msra.mxu0 %v2335
    %2359 = vmatpush.bf16.msra.mxu0 %v2334
    %2360 = vmatpush.bf16.msra.mxu0 %v2333
    %2361 = vmatmul.bf16.gmra.mxu0 %v2342
    %v2362 = vpop.f32.mrf.mxu0
    %v2363 = vadd.f32 0.0, %v2362
    %v2364 = vpop.f32.mrf.mxu0
    %v2365 = vadd.f32 0.0, %v2364
    %2366 = vmatmul.bf16.gmra.mxu0 %v2345
    %v2367 = vpop.f32.mrf.mxu0
    %v2368 = vadd.f32 0.0, %v2367
    %v2369 = vpop.f32.mrf.mxu0
    %v2370 = vadd.f32 0.0, %v2369
    %2371 = vmatmul.bf16.gmra.mxu0 %v2348
    %v2372 = vpop.f32.mrf.mxu0
    %v2373 = vadd.f32 0.0, %v2372
    %v2374 = vpop.f32.mrf.mxu0
    %v2375 = vadd.f32 0.0, %v2374
    %2376 = vmatmul.bf16.gmra.mxu0 %v2351
    %v2377 = vpop.f32.mrf.mxu0
    %v2378 = vadd.f32 0.0, %v2377
    %v2379 = vpop.f32.mrf.mxu0
    %v2380 = vadd.f32 0.0, %v2379
    %2381 = vdwg.mxu0
    %v2390 = vunpack.c.l.b16 %v2209
    %v2391 = vunpack.c.l.b16 %v2210
    %v2392 = vunpack.c.l.b16 %v2211
    %v2393 = vunpack.c.l.b16 %v2212
    %v2394 = vunpack.c.l.b16 %v2213
    %v2395 = vunpack.c.l.b16 %v2214
    %v2396 = vunpack.c.l.b16 %v2215
    %v2397 = vunpack.c.l.b16 %v2216
    %v2398 = vpack.c.b16 %v2391, %v2390
    %v2399 = vpack.c.b16 %v2393, %v2392
    %v2400 = vpack.c.b16 %v2395, %v2394
    %v2401 = vpack.c.b16 %v2397, %v2396
    %v2410 = vunpack.c.l.b16 %v2273
    %v2411 = vunpack.c.l.b16 %v2274
    %v2412 = vunpack.c.l.b16 %v2275
    %v2413 = vunpack.c.l.b16 %v2276
    %v2414 = vunpack.c.l.b16 %v2277
    %v2415 = vunpack.c.l.b16 %v2278
    %v2416 = vunpack.c.l.b16 %v2279
    %v2417 = vunpack.c.l.b16 %v2280
    %v2418 = vpack.c.b16 %v2411, %v2410
    %v2419 = vpack.c.b16 %v2413, %v2412
    %v2420 = vpack.c.b16 %v2415, %v2414
    %v2421 = vpack.c.b16 %v2417, %v2416
    %v2427 = vsel %vm164, %v2398, 0
    %v2430 = vsel %vm164, %v2399, 0
    %v2433 = vsel %vm164, %v2400, 0
    %v2436 = vsel %vm164, %v2401, 0
    %2438 = vmatpush.bf16.msra.mxu0 0
    %2439 = vmatpush.bf16.msra.mxu0 0
    %2440 = vmatpush.bf16.msra.mxu0 0
    %2441 = vmatpush.bf16.msra.mxu0 0
    %2442 = vmatpush.bf16.msra.mxu0 %v2421
    %2443 = vmatpush.bf16.msra.mxu0 %v2420
    %2444 = vmatpush.bf16.msra.mxu0 %v2419
    %2445 = vmatpush.bf16.msra.mxu0 %v2418
    %2446 = vmatmul.bf16.gmra.mxu0 %v2427
    %v2447 = vpop.f32.mrf.mxu0
    %v2448 = vadd.f32 0.0, %v2447
    %v2449 = vpop.f32.mrf.mxu0
    %v2450 = vadd.f32 0.0, %v2449
    %2451 = vmatmul.bf16.gmra.mxu0 %v2430
    %v2452 = vpop.f32.mrf.mxu0
    %v2453 = vadd.f32 0.0, %v2452
    %v2454 = vpop.f32.mrf.mxu0
    %v2455 = vadd.f32 0.0, %v2454
    %2456 = vmatmul.bf16.gmra.mxu0 %v2433
    %v2457 = vpop.f32.mrf.mxu0
    %v2458 = vadd.f32 0.0, %v2457
    %v2459 = vpop.f32.mrf.mxu0
    %v2460 = vadd.f32 0.0, %v2459
    %2461 = vmatmul.bf16.gmra.mxu0 %v2436
    %v2462 = vpop.f32.mrf.mxu0
    %v2463 = vadd.f32 0.0, %v2462
    %v2464 = vpop.f32.mrf.mxu0
    %v2465 = vadd.f32 0.0, %v2464
    %2466 = vdwg.mxu0
    %v2475 = vunpack.c.l.b16 %v2217
    %v2476 = vunpack.c.l.b16 %v2218
    %v2477 = vunpack.c.l.b16 %v2219
    %v2478 = vunpack.c.l.b16 %v2220
    %v2479 = vunpack.c.l.b16 %v2221
    %v2480 = vunpack.c.l.b16 %v2222
    %v2481 = vunpack.c.l.b16 %v2223
    %v2482 = vunpack.c.l.b16 %v2224
    %v2483 = vpack.c.b16 %v2476, %v2475
    %v2484 = vpack.c.b16 %v2478, %v2477
    %v2485 = vpack.c.b16 %v2480, %v2479
    %v2486 = vpack.c.b16 %v2482, %v2481
    %v2495 = vunpack.c.l.b16 %v2281
    %v2496 = vunpack.c.l.b16 %v2282
    %v2497 = vunpack.c.l.b16 %v2283
    %v2498 = vunpack.c.l.b16 %v2284
    %v2499 = vunpack.c.l.b16 %v2285
    %v2500 = vunpack.c.l.b16 %v2286
    %v2501 = vunpack.c.l.b16 %v2287
    %v2502 = vunpack.c.l.b16 %v2288
    %v2503 = vpack.c.b16 %v2496, %v2495
    %v2504 = vpack.c.b16 %v2498, %v2497
    %v2505 = vpack.c.b16 %v2500, %v2499
    %v2506 = vpack.c.b16 %v2502, %v2501
    %v2512 = vsel %vm164, %v2483, 0
    %v2515 = vsel %vm164, %v2484, 0
    %v2518 = vsel %vm164, %v2485, 0
    %v2521 = vsel %vm164, %v2486, 0
    %2523 = vmatpush.bf16.msra.mxu0 0
    %2524 = vmatpush.bf16.msra.mxu0 0
    %2525 = vmatpush.bf16.msra.mxu0 0
    %2526 = vmatpush.bf16.msra.mxu0 0
    %2527 = vmatpush.bf16.msra.mxu0 %v2506
    %2528 = vmatpush.bf16.msra.mxu0 %v2505
    %2529 = vmatpush.bf16.msra.mxu0 %v2504
    %2530 = vmatpush.bf16.msra.mxu0 %v2503
    %2531 = vmatmul.bf16.gmra.mxu0 %v2512
    %v2532 = vpop.f32.mrf.mxu0
    %v2533 = vadd.f32 0.0, %v2532
    %v2534 = vpop.f32.mrf.mxu0
    %v2535 = vadd.f32 0.0, %v2534
    %2536 = vmatmul.bf16.gmra.mxu0 %v2515
    %v2537 = vpop.f32.mrf.mxu0
    %v2538 = vadd.f32 0.0, %v2537
    %v2539 = vpop.f32.mrf.mxu0
    %v2540 = vadd.f32 0.0, %v2539
    %2541 = vmatmul.bf16.gmra.mxu0 %v2518
    %v2542 = vpop.f32.mrf.mxu0
    %v2543 = vadd.f32 0.0, %v2542
    %v2544 = vpop.f32.mrf.mxu0
    %v2545 = vadd.f32 0.0, %v2544
    %2546 = vmatmul.bf16.gmra.mxu0 %v2521
    %v2547 = vpop.f32.mrf.mxu0
    %v2548 = vadd.f32 0.0, %v2547
    %v2549 = vpop.f32.mrf.mxu0
    %v2550 = vadd.f32 0.0, %v2549
    %2551 = vdwg.mxu0
    %v2560 = vunpack.c.l.b16 %v2225
    %v2561 = vunpack.c.l.b16 %v2226
    %v2562 = vunpack.c.l.b16 %v2227
    %v2563 = vunpack.c.l.b16 %v2228
    %v2564 = vunpack.c.l.b16 %v2229
    %v2565 = vunpack.c.l.b16 %v2230
    %v2566 = vunpack.c.l.b16 %v2231
    %v2567 = vunpack.c.l.b16 %v2232
    %v2568 = vpack.c.b16 %v2561, %v2560
    %v2569 = vpack.c.b16 %v2563, %v2562
    %v2570 = vpack.c.b16 %v2565, %v2564
    %v2571 = vpack.c.b16 %v2567, %v2566
    %v2580 = vunpack.c.l.b16 %v2289
    %v2581 = vunpack.c.l.b16 %v2290
    %v2582 = vunpack.c.l.b16 %v2291
    %v2583 = vunpack.c.l.b16 %v2292
    %v2584 = vunpack.c.l.b16 %v2293
    %v2585 = vunpack.c.l.b16 %v2294
    %v2586 = vunpack.c.l.b16 %v2295
    %v2587 = vunpack.c.l.b16 %v2296
    %v2588 = vpack.c.b16 %v2581, %v2580
    %v2589 = vpack.c.b16 %v2583, %v2582
    %v2590 = vpack.c.b16 %v2585, %v2584
    %v2591 = vpack.c.b16 %v2587, %v2586
    %v2597 = vsel %vm164, %v2568, 0
    %v2600 = vsel %vm164, %v2569, 0
    %v2603 = vsel %vm164, %v2570, 0
    %v2606 = vsel %vm164, %v2571, 0
    %2608 = vmatpush.bf16.msra.mxu0 0
    %2609 = vmatpush.bf16.msra.mxu0 0
    %2610 = vmatpush.bf16.msra.mxu0 0
    %2611 = vmatpush.bf16.msra.mxu0 0
    %2612 = vmatpush.bf16.msra.mxu0 %v2591
    %2613 = vmatpush.bf16.msra.mxu0 %v2590
    %2614 = vmatpush.bf16.msra.mxu0 %v2589
    %2615 = vmatpush.bf16.msra.mxu0 %v2588
    %2616 = vmatmul.bf16.gmra.mxu0 %v2597
    %v2617 = vpop.f32.mrf.mxu0
    %v2618 = vadd.f32 0.0, %v2617
    %v2619 = vpop.f32.mrf.mxu0
    %v2620 = vadd.f32 0.0, %v2619
    %2621 = vmatmul.bf16.gmra.mxu0 %v2600
    %v2622 = vpop.f32.mrf.mxu0
    %v2623 = vadd.f32 0.0, %v2622
    %v2624 = vpop.f32.mrf.mxu0
    %v2625 = vadd.f32 0.0, %v2624
    %2626 = vmatmul.bf16.gmra.mxu0 %v2603
    %v2627 = vpop.f32.mrf.mxu0
    %v2628 = vadd.f32 0.0, %v2627
    %v2629 = vpop.f32.mrf.mxu0
    %v2630 = vadd.f32 0.0, %v2629
    %2631 = vmatmul.bf16.gmra.mxu0 %v2606
    %v2632 = vpop.f32.mrf.mxu0
    %v2633 = vadd.f32 0.0, %v2632
    %v2634 = vpop.f32.mrf.mxu0
    %v2635 = vadd.f32 0.0, %v2634
    %2636 = vdwg.mxu0
    %2637 = vst.msk [vmem:[#allocation11] sm:$0xff] %vm164, %v2363
    %2638 = vst.msk [vmem:[#allocation11 + $0x8] sm:$0xff] %vm164, %v2365
    %2639 = vst.msk [vmem:[#allocation11 + $0x10] sm:$0xff] %vm164, %v2368
    %2640 = vst.msk [vmem:[#allocation11 + $0x18] sm:$0xff] %vm164, %v2370
    %2641 = vst.msk [vmem:[#allocation11 + $0x20] sm:$0xff] %vm164, %v2373
    %2642 = vst.msk [vmem:[#allocation11 + $0x28] sm:$0xff] %vm164, %v2375
    %2643 = vst.msk [vmem:[#allocation11 + $0x30] sm:$0xff] %vm164, %v2378
    %2644 = vst.msk [vmem:[#allocation11 + $0x38] sm:$0xff] %vm164, %v2380
    %2645 = vst.msk [vmem:[#allocation11 + $0x40] sm:$0xff] %vm164, %v2448
    %2646 = vst.msk [vmem:[#allocation11 + $0x48] sm:$0xff] %vm164, %v2450
    %2647 = vst.msk [vmem:[#allocation11 + $0x50] sm:$0xff] %vm164, %v2453
    %2648 = vst.msk [vmem:[#allocation11 + $0x58] sm:$0xff] %vm164, %v2455
    %2649 = vst.msk [vmem:[#allocation11 + $0x60] sm:$0xff] %vm164, %v2458
    %2650 = vst.msk [vmem:[#allocation11 + $0x68] sm:$0xff] %vm164, %v2460
    %2651 = vst.msk [vmem:[#allocation11 + $0x70] sm:$0xff] %vm164, %v2463
    %2652 = vst.msk [vmem:[#allocation11 + $0x78] sm:$0xff] %vm164, %v2465
    %2653 = vst.msk [vmem:[#allocation11 + $0x80] sm:$0xff] %vm164, %v2533
    %2654 = vst.msk [vmem:[#allocation11 + $0x88] sm:$0xff] %vm164, %v2535
    %2655 = vst.msk [vmem:[#allocation11 + $0x90] sm:$0xff] %vm164, %v2538
    %2656 = vst.msk [vmem:[#allocation11 + $0x98] sm:$0xff] %vm164, %v2540
    %2657 = vst.msk [vmem:[#allocation11 + $0xa0] sm:$0xff] %vm164, %v2543
    %2658 = vst.msk [vmem:[#allocation11 + $0xa8] sm:$0xff] %vm164, %v2545
    %2659 = vst.msk [vmem:[#allocation11 + $0xb0] sm:$0xff] %vm164, %v2548
    %2660 = vst.msk [vmem:[#allocation11 + $0xb8] sm:$0xff] %vm164, %v2550
    %2661 = vst.msk [vmem:[#allocation11 + $0xc0] sm:$0xff] %vm164, %v2618
    %2662 = vst.msk [vmem:[#allocation11 + $0xc8] sm:$0xff] %vm164, %v2620
    %2663 = vst.msk [vmem:[#allocation11 + $0xd0] sm:$0xff] %vm164, %v2623
    %2664 = vst.msk [vmem:[#allocation11 + $0xd8] sm:$0xff] %vm164, %v2625
    %2665 = vst.msk [vmem:[#allocation11 + $0xe0] sm:$0xff] %vm164, %v2628
    %2666 = vst.msk [vmem:[#allocation11 + $0xe8] sm:$0xff] %vm164, %v2630
    %2667 = vst.msk [vmem:[#allocation11 + $0xf0] sm:$0xff] %vm164, %v2633
    %2668 = vst.msk [vmem:[#allocation11 + $0xf8] sm:$0xff] %vm164, %v2635
    // Predicated region
    $region42: #{tpu_custom_call.1} parent=1 // pred_check
      _
    $region43: #{tpu_custom_call.1} parent=1 // pred_check_branch
      %2670 = sbr.rel (0) target = $region45
    $region44: #{tpu_custom_call.1} parent=1 // pred_region
      %2672 = vsyncadd [#allocation4], 0
      %s2673 = sshll.u32 [#allocation11], 4
      %s2674 = int_to_ptr.vmem [resolvable:$true] %s2673
      %s2675 = sshll.u32 %s5, 4
      %s2676 = int_to_ptr.hbm [resolvable:$true] %s2675
      %2681 = dma.vmem_to_hbm [thread:$0]  %s2674, 4096, %s2676, [#allocation4], 128, 128, 8
    $region45: #{tpu_custom_call.1} parent=1 // pred_fallthru
      _
    // Predicated region
    $region46: #{tpu_custom_call.1} parent=1 // pred_check
      _
    $region47: #{tpu_custom_call.1} parent=1 // pred_check_branch
      %2683 = sbr.rel (0) target = $region49
    $region48: #{tpu_custom_call.1} parent=1 // pred_region
      %2685 = dma.done [#allocation4], 4096
    $region49: #{tpu_custom_call.1} parent=1 // pred_fallthru
      _
    %2686 = vsyncpa [#allocation3], 1
    %2687 = vsyncpa [#allocation6], 1
    %2688 = vsyncpa [#allocation9], 1
    %2689 = vsyncpa [#allocation4], 1

</llo_original>
